<compile_context>
chip_gen: v7x
topology: tpu7x:2x2x1
jax: 0.10.0
libtpu: 0.0.40
codegen_flags: <defaults>
</compile_context>

<pallas_src>
import jax
import jax.numpy as jnp
from jax import lax
from jax.experimental import pallas as pl
from jax.experimental.pallas import tpu as pltpu


LEAKY_SLOPE = 0.1   # nn.LeakyReLU(0.1) in the original module


def _round_up(x, m):
    return (x + m - 1) // m * m


# ------------------------- Pallas kernel (whole sequence, one launch) -------------------------

def perf_rnn_seq_kernel(ids_ref,         # SMEM (T, B) int32   (scalar prefetch)
                        control_ref,     # VMEM (T, B, C) f32  resident
                        fused_emb_ref,   # (E, H)   = emb_w @ cif_w[:, :E].T
                        cif_wc_ref,      # (C, H)
                        cif_b_ref,       # (1, H)   f32
                        w_ih_ref,        # (L, H, 3H)  gates stacked [r|z|n]
                        w_hh_ref,        # (L, H, 3H)
                        b_i_ref,         # (L, 1, 3H) f32: [b_ir+b_hr | b_iz+b_hz | b_in]
                        b_hn_ref,        # (L, 1, H)  f32
                        out_w_ref,       # (L, H, Ep)  lane-padded output FC
                        out_b_ref,       # (1, Ep)    f32
                        h0_ref,          # (L, B, H)  f32
                        logits_ref,      # out (T, B, Ep) f32, resident
                        hidden_out_ref,  # out (L, B, H) f32
                        h_carry):        # scratch VMEM (L, B, H) f32
    T, B, _ = control_ref.shape
    L, _, H = h0_ref.shape
    E = fused_emb_ref.shape[0]
    cdt = w_ih_ref.dtype                       # MXU operand dtype (f32 or bf16)

    h_carry[...] = h0_ref[...]

    # Hoisted constants (avoid per-iteration re-broadcast).
    row_iota = lax.broadcasted_iota(jnp.int32, (B, E), 0)
    lane_iota = lax.broadcasted_iota(jnp.int32, (B, E), 1)
    cif_b = cif_b_ref[...]                     # (1, H)
    out_b = out_b_ref[...]                     # (1, Ep)

    @pl.loop(0, T)
    def _step(t):
        # ---- embedding gather as a one-hot MXU dot (no OOB reads possible) ----
        one_hot = jnp.zeros((B, E), jnp.float32)
        for b in range(B):                     # static unroll over batch
            eid = ids_ref[t, b]
            one_hot = one_hot + jnp.where(
                (row_iota == b) & (lane_iota == eid), 1.0, 0.0)
        emb_x = jnp.dot(one_hot.astype(cdt), fused_emb_ref[...],
                        preferred_element_type=jnp.float32)

        # ---- x = LeakyReLU( emb + control @ W_ctrl + b ) ----
        ctrl = control_ref[t]                  # (B, C) dynamic leading-axis load
        x = emb_x + jnp.dot(ctrl.astype(cdt), cif_wc_ref[...],
                            preferred_element_type=jnp.float32) + cif_b
        x = jnp.where(x >= 0.0, x, LEAKY_SLOPE * x)

        # ---- single-step L-layer GRU, PyTorch gate order, 2 dots per layer ----
        layer_out = []
        for l in range(L):                     # static unroll over layers
            h = h_carry[l]                     # (B, H) f32
            gi = jnp.dot(x.astype(cdt), w_ih_ref[l],
                         preferred_element_type=jnp.float32) + b_i_ref[l]
            gh = jnp.dot(h.astype(cdt), w_hh_ref[l],
                         preferred_element_type=jnp.float32)
            rz = jax.nn.sigmoid(gi[:, :2 * H] + gh[:, :2 * H])
            r = rz[:, :H]
            z = rz[:, H:]
            n = jnp.tanh(gi[:, 2 * H:] + r * (gh[:, 2 * H:] + b_hn_ref[l]))
            h_new = (1.0 - z) * n + z * h      # (B, H) f32
            h_carry[l] = h_new                 # per-layer store into resident scratch
            layer_out.append(h_new)
            x = h_new

        # ---- output FC split per layer (lane-dense Ep columns, no hidden concat) ----
        acc = out_b + jnp.dot(layer_out[0].astype(cdt), out_w_ref[0],
                              preferred_element_type=jnp.float32)
        for l in range(1, L):
            acc = acc + jnp.dot(layer_out[l].astype(cdt), out_w_ref[l],
                                preferred_element_type=jnp.float32)
        logits_ref[t] = acc                    # (B, Ep) store into resident output block

    hidden_out_ref[...] = h_carry[...]


# ------------------------- wrappers -------------------------

def _resident(shape):
    """Full-array block with a constant index map (stays VMEM-resident)."""
    nd = len(shape)
    return pl.BlockSpec(shape, lambda *_args, _nd=nd: (0,) * _nd)


@jax.jit
def performance_rnn_forward_seq(params, events, controls, hidden):
    """Run T teacher-forced forward steps in ONE kernel launch.
    events: (T, B) int32; controls: (T, B, C) f32; hidden: (L, B, H) f32.
    Returns (logits (T, B, E), hidden (L, B, H))."""
    T, B = events.shape
    L, _, H = hidden.shape
    C = controls.shape[-1]
    E = params["fused_emb"].shape[0]
    Ep = params["out_w"].shape[-1]

    weight_order = ("fused_emb", "cif_wc", "cif_b", "w_ih", "w_hh",
                    "b_i", "b_hn", "out_w", "out_b")
    weights = [params[k] for k in weight_order]

    in_specs = [_resident((T, B, C))]                       # controls (resident)
    in_specs += [_resident(w.shape) for w in weights]       # weights (resident)
    in_specs += [_resident((L, B, H))]                      # h0

    grid_spec = pltpu.PrefetchScalarGridSpec(
        num_scalar_prefetch=1,
        grid=(1,),                                          # recurrence lives in pl.loop
        in_specs=in_specs,
        out_specs=(_resident((T, B, Ep)),                   # lane-dense logits slab
                   _resident((L, B, H))),
        scratch_shapes=[pltpu.VMEM((L, B, H), jnp.float32)],
    )

    logits_pad, new_hidden = pl.pallas_call(
        perf_rnn_seq_kernel,
        out_shape=(jax.ShapeDtypeStruct((T, B, Ep), jnp.float32),
                   jax.ShapeDtypeStruct((L, B, H), jnp.float32)),
        grid_spec=grid_spec,
        compiler_params=pltpu.CompilerParams(
            dimension_semantics=("arbitrary",)),
    )(events.astype(jnp.int32),
      controls.astype(jnp.float32),
      *weights,
      hidden.astype(jnp.float32))
    return logits_pad[..., :E], new_hidden


def performance_rnn_forward(params, event, control, hidden):
    """Exact PyTorch forward interface (one step): event (1,B) int, control
    (1,B,C), hidden (L,B,H) -> (output (1,B,E), hidden (L,B,H))."""
    assert event.ndim == 2 and event.shape[0] == 1
    return performance_rnn_forward_seq(params, event, control, hidden)


def init_to_hidden(raw, init):
    """Plain-JAX glue matching module.init_to_hidden: tanh(Linear).view(L,B,H)."""
    L = raw["w_ih"].shape[0]
    H = raw["w_hh"].shape[-1]
    out = jnp.tanh(init @ raw["inithid_w"].T + raw["inithid_b"])
    return out.reshape(L, init.shape[0], H)


# ------------------------- parameter construction -------------------------

def make_raw_params(key, event_dim, control_dim, init_dim, hidden_dim, gru_layers):
    """PyTorch-layout parameters (Linear weights are (out, in))."""
    def xavier(k, shape_out_in):
        fan_out, fan_in = shape_out_in
        std = (2.0 / (fan_in + fan_out)) ** 0.5
        return std * jax.random.normal(k, shape_out_in, jnp.float32)

    concat_dim = event_dim + control_dim
    ks = jax.random.split(key, 10)
    scale = 1.0 / (hidden_dim ** 0.5)
    p = {}
    p["emb_w"] = xavier(ks[0], (event_dim, event_dim))
    p["inithid_w"] = xavier(ks[1], (gru_layers * hidden_dim, init_dim))
    p["inithid_b"] = jnp.zeros((gru_layers * hidden_dim,), jnp.float32)
    p["cif_w"] = xavier(ks[2], (hidden_dim, concat_dim))
    p["cif_b"] = 0.01 * jax.random.normal(ks[3], (hidden_dim,), jnp.float32)
    # GRU: layer-0 input dim == hidden_dim, so all layers stack cleanly.
    p["w_ih"] = scale * jax.random.normal(
        ks[4], (gru_layers, 3 * hidden_dim, hidden_dim), jnp.float32)
    p["w_hh"] = scale * jax.random.normal(
        ks[5], (gru_layers, 3 * hidden_dim, hidden_dim), jnp.float32)
    p["b_ih"] = scale * jax.random.normal(
        ks[6], (gru_layers, 3 * hidden_dim), jnp.float32)
    p["b_hh"] = scale * jax.random.normal(
        ks[7], (gru_layers, 3 * hidden_dim), jnp.float32)
    p["out_w"] = xavier(ks[8], (event_dim, gru_layers * hidden_dim))
    p["out_b"] = jnp.zeros((event_dim,), jnp.float32)
    return p


def prepare_kernel_params(raw, weight_dtype=jnp.float32):
    """Kernel-friendly layout: fused embedding, stacked gate weights, folded
    biases, lane-padded output FC.  weight_dtype=bf16 for v6e/v7x MXU/DMA."""
    E = raw["emb_w"].shape[0]
    L = raw["w_ih"].shape[0]
    H = raw["w_hh"].shape[-1]
    Ep = max(128, _round_up(E, 128))
    b_ih, b_hh = raw["b_ih"], raw["b_hh"]

    p = {}
    p["fused_emb"] = (raw["emb_w"] @ raw["cif_w"][:, :E].T).astype(weight_dtype)   # (E, H)
    p["cif_wc"] = raw["cif_w"][:, E:].T.astype(weight_dtype)                       # (C, H)
    p["cif_b"] = raw["cif_b"].reshape(1, H).astype(jnp.float32)
    p["w_ih"] = jnp.swapaxes(raw["w_ih"], 1, 2).astype(weight_dtype)               # (L, H, 3H)
    p["w_hh"] = jnp.swapaxes(raw["w_hh"], 1, 2).astype(weight_dtype)               # (L, H, 3H)
    b_i = jnp.concatenate(
        [b_ih[:, :2 * H] + b_hh[:, :2 * H], b_ih[:, 2 * H:]], axis=-1)             # (L, 3H)
    p["b_i"] = b_i[:, None, :].astype(jnp.float32)                                 # (L, 1, 3H)
    p["b_hn"] = b_hh[:, 2 * H:][:, None, :].astype(jnp.float32)                    # (L, 1, H)
    out_w = jnp.transpose(raw["out_w"].reshape(E, L, H), (1, 2, 0))                # (L, H, E)
    p["out_w"] = jnp.zeros((L, H, Ep), jnp.float32).at[:, :, :E].set(
        out_w).astype(weight_dtype)                                                # (L, H, Ep)
    p["out_b"] = jnp.zeros((1, Ep), jnp.float32).at[0, :E].set(raw["out_b"])
    return p


# ------------------------- pure-JAX reference (verification) -------------------------

def ref_forward_step(raw, event, control, hidden):
    """event: (B,) int; control: (B, C); hidden: (L, B, H)."""
    L, B, H = hidden.shape
    emb = raw["emb_w"][event]                                        # (B, E)
    concat = jnp.concatenate([emb, control], axis=-1)
    x = concat @ raw["cif_w"].T + raw["cif_b"]
    x = jnp.where(x >= 0.0, x, LEAKY_SLOPE * x)
    new_h = []
    for l in range(L):
        h = hidden[l]
        gi = x @ raw["w_ih"][l].T + raw["b_ih"][l]
        gh = h @ raw["w_hh"][l].T + raw["b_hh"][l]
        r = jax.nn.sigmoid(gi[:, :H] + gh[:, :H])
        z = jax.nn.sigmoid(gi[:, H:2 * H] + gh[:, H:2 * H])
        n = jnp.tanh(gi[:, 2 * H:] + r * gh[:, 2 * H:])
        hn = (1.0 - z) * n + z * h
        new_h.append(hn)
        x = hn
    hidden_new = jnp.stack(new_h, 0)
    hcat = hidden_new.transpose(1, 0, 2).reshape(B, -1)
    logits = hcat @ raw["out_w"].T + raw["out_b"]
    return logits, hidden_new


# ------------------------- main -------------------------

if __name__ == "__main__":
    event_dim, control_dim, init_dim = 16, 8, 8
    hidden_dim, gru_layers, batch, steps = 32, 3, 2, 8

    key = jax.random.PRNGKey(0)
    raw = make_raw_params(key, event_dim, control_dim, init_dim,
                          hidden_dim, gru_layers)
    kparams = prepare_kernel_params(raw)                             # f32 (strict check)

    kc, ki, ke = jax.random.split(jax.random.fold_in(key, 1), 3)
    init = jax.random.normal(ki, (batch, init_dim), jnp.float32)
    hidden0 = init_to_hidden(raw, init)                              # (L, B, H)

    # --- single-step forward (exact module.forward semantics) ---
    event = jnp.full((1, batch), event_dim - 1, dtype=jnp.int32)     # get_primary_event
    control = jax.random.normal(kc, (1, batch, control_dim), jnp.float32)
    out, new_hidden = performance_rnn_forward(kparams, event, control, hidden0)
    jax.block_until_ready((out, new_hidden))

    out_ref, hid_ref = ref_forward_step(raw, event[0], control[0], hidden0)
    assert out.shape == (1, batch, event_dim)
    assert new_hidden.shape == (gru_layers, batch, hidden_dim)
    assert jnp.allclose(out[0], out_ref, atol=1e-4, rtol=1e-4)
    assert jnp.allclose(new_hidden, hid_ref, atol=1e-4, rtol=1e-4)

    # --- fused multi-step (T forward steps, ONE kernel launch) ---
    events_seq = jax.random.randint(ke, (steps, batch), 0, event_dim, dtype=jnp.int32)
    controls_seq = jax.random.normal(kc, (steps, batch, control_dim), jnp.float32)
    logits_seq, hid_seq = performance_rnn_forward_seq(
        kparams, events_seq, controls_seq, hidden0)
    jax.block_until_ready((logits_seq, hid_seq))

    h = hidden0
    ref_logits = []
    for t in range(steps):
        lg, h = ref_forward_step(raw, events_seq[t], controls_seq[t], h)
        ref_logits.append(lg)
    ref_logits = jnp.stack(ref_logits, 0)
    assert logits_seq.shape == (steps, batch, event_dim)
    assert jnp.allclose(logits_seq, ref_logits, atol=1e-4, rtol=1e-4)
    assert jnp.allclose(hid_seq, h, atol=1e-4, rtol=1e-4)

    # --- bf16 weight path (v6e/v7x MXU/DMA); f32 accumulation, looser tolerance ---
    kparams_bf16 = prepare_kernel_params(raw, weight_dtype=jnp.bfloat16)
    logits_bf16, hid_bf16 = performance_rnn_forward_seq(
        kparams_bf16, events_seq, controls_seq, hidden0)
    jax.block_until_ready((logits_bf16, hid_bf16))
    assert jnp.allclose(logits_bf16, ref_logits, atol=1e-1, rtol=1e-1)
    assert jnp.allclose(hid_bf16, h, atol=1e-1, rtol=1e-1)

    print("KERNEL_OK")
</pallas_src>

<mosaic_0001>
module attributes {stable_mosaic.version = 11 : i64} {
  func.func @perf_rnn_seq_kernel(%arg0: i32, %arg1: memref<1x2xi32, #tpu.memory_space<smem>>, %arg2: memref<1x2x8xf32, #tpu.memory_space<vmem>>, %arg3: memref<16x32xf32, #tpu.memory_space<vmem>>, %arg4: memref<8x32xf32, #tpu.memory_space<vmem>>, %arg5: memref<1x32xf32, #tpu.memory_space<vmem>>, %arg6: memref<3x32x96xf32, #tpu.memory_space<vmem>>, %arg7: memref<3x32x96xf32, #tpu.memory_space<vmem>>, %arg8: memref<3x1x96xf32, #tpu.memory_space<vmem>>, %arg9: memref<3x1x32xf32, #tpu.memory_space<vmem>>, %arg10: memref<3x32x128xf32, #tpu.memory_space<vmem>>, %arg11: memref<1x128xf32, #tpu.memory_space<vmem>>, %arg12: memref<3x2x32xf32, #tpu.memory_space<vmem>>, %arg13: memref<1x2x128xf32, #tpu.memory_space<vmem>>, %arg14: memref<3x2x32xf32, #tpu.memory_space<vmem>>, %arg15: memref<3x2x32xf32, #tpu.memory_space<vmem>>) attributes {dimension_semantics = [#tpu.dimension_semantics<arbitrary>], iteration_bounds = array<i64: 1>, scalar_prefetch = 1 : i64, scratch_operands = 1 : i64, tpu.core_type = #tpu.core_type<tc>, window_params = [{pipeline_mode = #tpu.pipeline_mode<synchronous>, transform_indices = @transform_0, window_bounds = array<i64: 1, 2, 8>}, {pipeline_mode = #tpu.pipeline_mode<synchronous>, transform_indices = @transform_1, window_bounds = array<i64: 16, 32>}, {pipeline_mode = #tpu.pipeline_mode<synchronous>, transform_indices = @transform_2, window_bounds = array<i64: 8, 32>}, {pipeline_mode = #tpu.pipeline_mode<synchronous>, transform_indices = @transform_3, window_bounds = array<i64: 1, 32>}, {pipeline_mode = #tpu.pipeline_mode<synchronous>, transform_indices = @transform_4, window_bounds = array<i64: 3, 32, 96>}, {pipeline_mode = #tpu.pipeline_mode<synchronous>, transform_indices = @transform_5, window_bounds = array<i64: 3, 32, 96>}, {pipeline_mode = #tpu.pipeline_mode<synchronous>, transform_indices = @transform_6, window_bounds = array<i64: 3, 1, 96>}, {pipeline_mode = #tpu.pipeline_mode<synchronous>, transform_indices = @transform_7, window_bounds = array<i64: 3, 1, 32>}, {pipeline_mode = #tpu.pipeline_mode<synchronous>, transform_indices = @transform_8, window_bounds = array<i64: 3, 32, 128>}, {pipeline_mode = #tpu.pipeline_mode<synchronous>, transform_indices = @transform_9, window_bounds = array<i64: 1, 128>}, {pipeline_mode = #tpu.pipeline_mode<synchronous>, transform_indices = @transform_10, window_bounds = array<i64: 3, 2, 32>}, {pipeline_mode = #tpu.pipeline_mode<synchronous>, transform_indices = @transform_11, window_bounds = array<i64: 1, 2, 128>}, {pipeline_mode = #tpu.pipeline_mode<synchronous>, transform_indices = @transform_12, window_bounds = array<i64: 3, 2, 32>}]} {
    %c0 = arith.constant 0 : index
    %c0_0 = arith.constant 0 : index
    %c0_1 = arith.constant 0 : index
    %0 = vector.load %arg12[%c0, %c0_0, %c0_1] : memref<3x2x32xf32, #tpu.memory_space<vmem>>, vector<3x2x32xf32>
    %c0_2 = arith.constant 0 : index
    %c0_3 = arith.constant 0 : index
    %c0_4 = arith.constant 0 : index
    %1 = vector.load %arg15[%c0_2, %c0_3, %c0_4] : memref<3x2x32xf32, #tpu.memory_space<vmem>>, vector<3x2x32xf32>
    tpu.vector_store %arg15[%c0_2, %c0_3, %c0_4], %0 {strides = array<i32>} : memref<3x2x32xf32, #tpu.memory_space<vmem>>, vector<3x2x32xf32>,
    %2 = tpu.iota {dimensions = array<i32: 0>} : vector<2x16xi32>
    %3 = tpu.iota {dimensions = array<i32: 1>} : vector<2x16xi32>
    %c0_5 = arith.constant 0 : index
    %c0_6 = arith.constant 0 : index
    %4 = vector.load %arg5[%c0_5, %c0_6] : memref<1x32xf32, #tpu.memory_space<vmem>>, vector<1x32xf32>
    %c0_7 = arith.constant 0 : index
    %c0_8 = arith.constant 0 : index
    %5 = vector.load %arg11[%c0_7, %c0_8] : memref<1x128xf32, #tpu.memory_space<vmem>>, vector<1x128xf32>
    %c0_i32 = arith.constant 0 : i32
    %c1_i32 = arith.constant 1 : i32
    %6 = arith.muli %c0_i32, %c1_i32 : i32
    %c0_i32_9 = arith.constant 0 : i32
    %7 = arith.addi %c0_i32_9, %6 : i32
    %cst = arith.constant 0.000000e+00 : f32
    %8 = vector.broadcast %cst : f32 to vector<2x16xf32>
    %9 = arith.index_cast %7 : i32 to index
    %c0_10 = arith.constant 0 : index
    %10 = memref.load %arg1[%9, %c0_10] : memref<1x2xi32, #tpu.memory_space<smem>>
    %c0_i32_11 = arith.constant 0 : i32
    %11 = vector.broadcast %c0_i32_11 : i32 to vector<2x16xi32>
    %12 = arith.cmpi eq, %2, %11 : vector<2x16xi32>
    %13 = vector.broadcast %10 : i32 to vector<2x16xi32>
    %14 = arith.cmpi eq, %3, %13 : vector<2x16xi32>
    %15 = arith.andi %12, %14 : vector<2x16xi1>
    %cst_12 = arith.constant 1.000000e+00 : f32
    %cst_13 = arith.constant 0.000000e+00 : f32
    %16 = vector.broadcast %cst_12 : f32 to vector<2x16xf32>
    %17 = vector.broadcast %cst_13 : f32 to vector<2x16xf32>
    %18 = arith.select %15, %16, %17 : vector<2x16xi1>, vector<2x16xf32>
    %19 = arith.addf %8, %18 : vector<2x16xf32>
    %20 = arith.index_cast %7 : i32 to index
    %c1 = arith.constant 1 : index
    %21 = memref.load %arg1[%20, %c1] : memref<1x2xi32, #tpu.memory_space<smem>>
    %c1_i32_14 = arith.constant 1 : i32
    %22 = vector.broadcast %c1_i32_14 : i32 to vector<2x16xi32>
    %23 = arith.cmpi eq, %2, %22 : vector<2x16xi32>
    %24 = vector.broadcast %21 : i32 to vector<2x16xi32>
    %25 = arith.cmpi eq, %3, %24 : vector<2x16xi32>
    %26 = arith.andi %23, %25 : vector<2x16xi1>
    %cst_15 = arith.constant 1.000000e+00 : f32
    %cst_16 = arith.constant 0.000000e+00 : f32
    %27 = vector.broadcast %cst_15 : f32 to vector<2x16xf32>
    %28 = vector.broadcast %cst_16 : f32 to vector<2x16xf32>
    %29 = arith.select %26, %27, %28 : vector<2x16xi1>, vector<2x16xf32>
    %30 = arith.addf %19, %29 : vector<2x16xf32>
    %c0_17 = arith.constant 0 : index
    %c0_18 = arith.constant 0 : index
    %31 = vector.load %arg3[%c0_17, %c0_18] : memref<16x32xf32, #tpu.memory_space<vmem>>, vector<16x32xf32>
    %cst_19 = arith.constant dense<0.000000e+00> : vector<2x32xf32>
    %32 = tpu.matmul %30, %31, %cst_19 {dimension_numbers = #tpu.dot_dimension_numbers<[1], [0], [0], [1], [0, 0, 1, 1], [], []>} : vector<2x16xf32>, vector<16x32xf32>, vector<2x32xf32> -> vector<2x32xf32>
    %33 = arith.index_cast %7 : i32 to index
    %c0_20 = arith.constant 0 : index
    %c0_21 = arith.constant 0 : index
    %34 = vector.load %arg2[%33, %c0_20, %c0_21] : memref<1x2x8xf32, #tpu.memory_space<vmem>>, vector<1x2x8xf32>
    %35 = vector.shape_cast %34 : vector<1x2x8xf32> to vector<2x8xf32>
    %c0_22 = arith.constant 0 : index
    %c0_23 = arith.constant 0 : index
    %36 = vector.load %arg4[%c0_22, %c0_23] : memref<8x32xf32, #tpu.memory_space<vmem>>, vector<8x32xf32>
    %cst_24 = arith.constant dense<0.000000e+00> : vector<2x32xf32>
    %37 = tpu.matmul %35, %36, %cst_24 {dimension_numbers = #tpu.dot_dimension_numbers<[1], [0], [0], [1], [0, 0, 1, 1], [], []>} : vector<2x8xf32>, vector<8x32xf32>, vector<2x32xf32> -> vector<2x32xf32>
    %38 = arith.addf %32, %37 : vector<2x32xf32>
    %39 = vector.broadcast %4 : vector<1x32xf32> to vector<2x32xf32>
    %40 = arith.addf %38, %39 : vector<2x32xf32>
    %cst_25 = arith.constant 0.000000e+00 : f32
    %41 = vector.broadcast %cst_25 : f32 to vector<2x32xf32>
    %42 = arith.cmpf oge, %40, %41 : vector<2x32xf32>
    %cst_26 = arith.constant 1.000000e-01 : f32
    %43 = vector.broadcast %cst_26 : f32 to vector<2x32xf32>
    %44 = arith.mulf %43, %40 : vector<2x32xf32>
    %45 = arith.select %42, %40, %44 : vector<2x32xi1>, vector<2x32xf32>
    %c0_27 = arith.constant 0 : index
    %c0_28 = arith.constant 0 : index
    %c0_29 = arith.constant 0 : index
    %46 = vector.load %arg15[%c0_27, %c0_28, %c0_29] : memref<3x2x32xf32, #tpu.memory_space<vmem>>, vector<1x2x32xf32>
    %47 = vector.shape_cast %46 : vector<1x2x32xf32> to vector<2x32xf32>
    %c0_30 = arith.constant 0 : index
    %c0_31 = arith.constant 0 : index
    %c0_32 = arith.constant 0 : index
    %48 = vector.load %arg6[%c0_30, %c0_31, %c0_32] : memref<3x32x96xf32, #tpu.memory_space<vmem>>, vector<1x32x96xf32>
    %49 = vector.shape_cast %48 : vector<1x32x96xf32> to vector<32x96xf32>
    %cst_33 = arith.constant dense<0.000000e+00> : vector<2x96xf32>
    %50 = tpu.matmul %45, %49, %cst_33 {dimension_numbers = #tpu.dot_dimension_numbers<[1], [0], [0], [1], [0, 0, 1, 1], [], []>} : vector<2x32xf32>, vector<32x96xf32>, vector<2x96xf32> -> vector<2x96xf32>
    %c0_34 = arith.constant 0 : index
    %c0_35 = arith.constant 0 : index
    %c0_36 = arith.constant 0 : index
    %51 = vector.load %arg8[%c0_34, %c0_35, %c0_36] : memref<3x1x96xf32, #tpu.memory_space<vmem>>, vector<1x1x96xf32>
    %52 = vector.shape_cast %51 : vector<1x1x96xf32> to vector<1x96xf32>
    %53 = vector.broadcast %52 : vector<1x96xf32> to vector<2x96xf32>
    %54 = arith.addf %50, %53 : vector<2x96xf32>
    %c0_37 = arith.constant 0 : index
    %c0_38 = arith.constant 0 : index
    %c0_39 = arith.constant 0 : index
    %55 = vector.load %arg7[%c0_37, %c0_38, %c0_39] : memref<3x32x96xf32, #tpu.memory_space<vmem>>, vector<1x32x96xf32>
    %56 = vector.shape_cast %55 : vector<1x32x96xf32> to vector<32x96xf32>
    %cst_40 = arith.constant dense<0.000000e+00> : vector<2x96xf32>
    %57 = tpu.matmul %47, %56, %cst_40 {dimension_numbers = #tpu.dot_dimension_numbers<[1], [0], [0], [1], [0, 0, 1, 1], [], []>} : vector<2x32xf32>, vector<32x96xf32>, vector<2x96xf32> -> vector<2x96xf32>
    %58 = vector.extract_strided_slice %54 {offsets = [0, 0], sizes = [2, 64], strides = [1, 1]} : vector<2x96xf32> to vector<2x64xf32>
    %59 = vector.extract_strided_slice %57 {offsets = [0, 0], sizes = [2, 64], strides = [1, 1]} : vector<2x96xf32> to vector<2x64xf32>
    %60 = arith.addf %58, %59 : vector<2x64xf32>
    %61 = arith.negf %60 : vector<2x64xf32>
    %62 = math.exp %61 : vector<2x64xf32>
    %cst_41 = arith.constant 1.000000e+00 : f32
    %63 = vector.broadcast %cst_41 : f32 to vector<2x64xf32>
    %64 = arith.addf %63, %62 : vector<2x64xf32>
    %65 = arith.divf %63, %64 : vector<2x64xf32>
    %66 = vector.extract_strided_slice %65 {offsets = [0, 0], sizes = [2, 32], strides = [1, 1]} : vector<2x64xf32> to vector<2x32xf32>
    %67 = vector.extract_strided_slice %65 {offsets = [0, 32], sizes = [2, 32], strides = [1, 1]} : vector<2x64xf32> to vector<2x32xf32>
    %68 = vector.extract_strided_slice %54 {offsets = [0, 64], sizes = [2, 32], strides = [1, 1]} : vector<2x96xf32> to vector<2x32xf32>
    %69 = vector.extract_strided_slice %57 {offsets = [0, 64], sizes = [2, 32], strides = [1, 1]} : vector<2x96xf32> to vector<2x32xf32>
    %c0_42 = arith.constant 0 : index
    %c0_43 = arith.constant 0 : index
    %c0_44 = arith.constant 0 : index
    %70 = vector.load %arg9[%c0_42, %c0_43, %c0_44] : memref<3x1x32xf32, #tpu.memory_space<vmem>>, vector<1x1x32xf32>
    %71 = vector.shape_cast %70 : vector<1x1x32xf32> to vector<1x32xf32>
    %72 = vector.broadcast %71 : vector<1x32xf32> to vector<2x32xf32>
    %73 = arith.addf %69, %72 : vector<2x32xf32>
    %74 = arith.mulf %66, %73 : vector<2x32xf32>
    %75 = arith.addf %68, %74 : vector<2x32xf32>
    %76 = math.tanh %75 : vector<2x32xf32>
    %cst_45 = arith.constant 1.000000e+00 : f32
    %77 = vector.broadcast %cst_45 : f32 to vector<2x32xf32>
    %78 = arith.subf %77, %67 : vector<2x32xf32>
    %79 = arith.mulf %78, %76 : vector<2x32xf32>
    %80 = arith.mulf %67, %47 : vector<2x32xf32>
    %81 = arith.addf %79, %80 : vector<2x32xf32>
    %c0_46 = arith.constant 0 : index
    %c0_47 = arith.constant 0 : index
    %c0_48 = arith.constant 0 : index
    %82 = vector.load %arg15[%c0_46, %c0_47, %c0_48] : memref<3x2x32xf32, #tpu.memory_space<vmem>>, vector<1x2x32xf32>
    %83 = vector.shape_cast %82 : vector<1x2x32xf32> to vector<2x32xf32>
    %84 = vector.shape_cast %81 : vector<2x32xf32> to vector<1x2x32xf32>
    tpu.vector_store %arg15[%c0_46, %c0_47, %c0_48], %84 {strides = array<i32>} : memref<3x2x32xf32, #tpu.memory_space<vmem>>, vector<1x2x32xf32>,
    %c1_49 = arith.constant 1 : index
    %c0_50 = arith.constant 0 : index
    %c0_51 = arith.constant 0 : index
    %85 = vector.load %arg15[%c1_49, %c0_50, %c0_51] : memref<3x2x32xf32, #tpu.memory_space<vmem>>, vector<1x2x32xf32>
    %86 = vector.shape_cast %85 : vector<1x2x32xf32> to vector<2x32xf32>
    %c1_52 = arith.constant 1 : index
    %c0_53 = arith.constant 0 : index
    %c0_54 = arith.constant 0 : index
    %87 = vector.load %arg6[%c1_52, %c0_53, %c0_54] : memref<3x32x96xf32, #tpu.memory_space<vmem>>, vector<1x32x96xf32>
    %88 = vector.shape_cast %87 : vector<1x32x96xf32> to vector<32x96xf32>
    %cst_55 = arith.constant dense<0.000000e+00> : vector<2x96xf32>
    %89 = tpu.matmul %81, %88, %cst_55 {dimension_numbers = #tpu.dot_dimension_numbers<[1], [0], [0], [1], [0, 0, 1, 1], [], []>} : vector<2x32xf32>, vector<32x96xf32>, vector<2x96xf32> -> vector<2x96xf32>
    %c1_56 = arith.constant 1 : index
    %c0_57 = arith.constant 0 : index
    %c0_58 = arith.constant 0 : index
    %90 = vector.load %arg8[%c1_56, %c0_57, %c0_58] : memref<3x1x96xf32, #tpu.memory_space<vmem>>, vector<1x1x96xf32>
    %91 = vector.shape_cast %90 : vector<1x1x96xf32> to vector<1x96xf32>
    %92 = vector.broadcast %91 : vector<1x96xf32> to vector<2x96xf32>
    %93 = arith.addf %89, %92 : vector<2x96xf32>
    %c1_59 = arith.constant 1 : index
    %c0_60 = arith.constant 0 : index
    %c0_61 = arith.constant 0 : index
    %94 = vector.load %arg7[%c1_59, %c0_60, %c0_61] : memref<3x32x96xf32, #tpu.memory_space<vmem>>, vector<1x32x96xf32>
    %95 = vector.shape_cast %94 : vector<1x32x96xf32> to vector<32x96xf32>
    %cst_62 = arith.constant dense<0.000000e+00> : vector<2x96xf32>
    %96 = tpu.matmul %86, %95, %cst_62 {dimension_numbers = #tpu.dot_dimension_numbers<[1], [0], [0], [1], [0, 0, 1, 1], [], []>} : vector<2x32xf32>, vector<32x96xf32>, vector<2x96xf32> -> vector<2x96xf32>
    %97 = vector.extract_strided_slice %93 {offsets = [0, 0], sizes = [2, 64], strides = [1, 1]} : vector<2x96xf32> to vector<2x64xf32>
    %98 = vector.extract_strided_slice %96 {offsets = [0, 0], sizes = [2, 64], strides = [1, 1]} : vector<2x96xf32> to vector<2x64xf32>
    %99 = arith.addf %97, %98 : vector<2x64xf32>
    %100 = arith.negf %99 : vector<2x64xf32>
    %101 = math.exp %100 : vector<2x64xf32>
    %cst_63 = arith.constant 1.000000e+00 : f32
    %102 = vector.broadcast %cst_63 : f32 to vector<2x64xf32>
    %103 = arith.addf %102, %101 : vector<2x64xf32>
    %104 = arith.divf %102, %103 : vector<2x64xf32>
    %105 = vector.extract_strided_slice %104 {offsets = [0, 0], sizes = [2, 32], strides = [1, 1]} : vector<2x64xf32> to vector<2x32xf32>
    %106 = vector.extract_strided_slice %104 {offsets = [0, 32], sizes = [2, 32], strides = [1, 1]} : vector<2x64xf32> to vector<2x32xf32>
    %107 = vector.extract_strided_slice %93 {offsets = [0, 64], sizes = [2, 32], strides = [1, 1]} : vector<2x96xf32> to vector<2x32xf32>
    %108 = vector.extract_strided_slice %96 {offsets = [0, 64], sizes = [2, 32], strides = [1, 1]} : vector<2x96xf32> to vector<2x32xf32>
    %c1_64 = arith.constant 1 : index
    %c0_65 = arith.constant 0 : index
    %c0_66 = arith.constant 0 : index
    %109 = vector.load %arg9[%c1_64, %c0_65, %c0_66] : memref<3x1x32xf32, #tpu.memory_space<vmem>>, vector<1x1x32xf32>
    %110 = vector.shape_cast %109 : vector<1x1x32xf32> to vector<1x32xf32>
    %111 = vector.broadcast %110 : vector<1x32xf32> to vector<2x32xf32>
    %112 = arith.addf %108, %111 : vector<2x32xf32>
    %113 = arith.mulf %105, %112 : vector<2x32xf32>
    %114 = arith.addf %107, %113 : vector<2x32xf32>
    %115 = math.tanh %114 : vector<2x32xf32>
    %cst_67 = arith.constant 1.000000e+00 : f32
    %116 = vector.broadcast %cst_67 : f32 to vector<2x32xf32>
    %117 = arith.subf %116, %106 : vector<2x32xf32>
    %118 = arith.mulf %117, %115 : vector<2x32xf32>
    %119 = arith.mulf %106, %86 : vector<2x32xf32>
    %120 = arith.addf %118, %119 : vector<2x32xf32>
    %c1_68 = arith.constant 1 : index
    %c0_69 = arith.constant 0 : index
    %c0_70 = arith.constant 0 : index
    %121 = vector.load %arg15[%c1_68, %c0_69, %c0_70] : memref<3x2x32xf32, #tpu.memory_space<vmem>>, vector<1x2x32xf32>
    %122 = vector.shape_cast %121 : vector<1x2x32xf32> to vector<2x32xf32>
    %123 = vector.shape_cast %120 : vector<2x32xf32> to vector<1x2x32xf32>
    tpu.vector_store %arg15[%c1_68, %c0_69, %c0_70], %123 {strides = array<i32>} : memref<3x2x32xf32, #tpu.memory_space<vmem>>, vector<1x2x32xf32>,
    %c2 = arith.constant 2 : index
    %c0_71 = arith.constant 0 : index
    %c0_72 = arith.constant 0 : index
    %124 = vector.load %arg15[%c2, %c0_71, %c0_72] : memref<3x2x32xf32, #tpu.memory_space<vmem>>, vector<1x2x32xf32>
    %125 = vector.shape_cast %124 : vector<1x2x32xf32> to vector<2x32xf32>
    %c2_73 = arith.constant 2 : index
    %c0_74 = arith.constant 0 : index
    %c0_75 = arith.constant 0 : index
    %126 = vector.load %arg6[%c2_73, %c0_74, %c0_75] : memref<3x32x96xf32, #tpu.memory_space<vmem>>, vector<1x32x96xf32>
    %127 = vector.shape_cast %126 : vector<1x32x96xf32> to vector<32x96xf32>
    %cst_76 = arith.constant dense<0.000000e+00> : vector<2x96xf32>
    %128 = tpu.matmul %120, %127, %cst_76 {dimension_numbers = #tpu.dot_dimension_numbers<[1], [0], [0], [1], [0, 0, 1, 1], [], []>} : vector<2x32xf32>, vector<32x96xf32>, vector<2x96xf32> -> vector<2x96xf32>
    %c2_77 = arith.constant 2 : index
    %c0_78 = arith.constant 0 : index
    %c0_79 = arith.constant 0 : index
    %129 = vector.load %arg8[%c2_77, %c0_78, %c0_79] : memref<3x1x96xf32, #tpu.memory_space<vmem>>, vector<1x1x96xf32>
    %130 = vector.shape_cast %129 : vector<1x1x96xf32> to vector<1x96xf32>
    %131 = vector.broadcast %130 : vector<1x96xf32> to vector<2x96xf32>
    %132 = arith.addf %128, %131 : vector<2x96xf32>
    %c2_80 = arith.constant 2 : index
    %c0_81 = arith.constant 0 : index
    %c0_82 = arith.constant 0 : index
    %133 = vector.load %arg7[%c2_80, %c0_81, %c0_82] : memref<3x32x96xf32, #tpu.memory_space<vmem>>, vector<1x32x96xf32>
    %134 = vector.shape_cast %133 : vector<1x32x96xf32> to vector<32x96xf32>
    %cst_83 = arith.constant dense<0.000000e+00> : vector<2x96xf32>
    %135 = tpu.matmul %125, %134, %cst_83 {dimension_numbers = #tpu.dot_dimension_numbers<[1], [0], [0], [1], [0, 0, 1, 1], [], []>} : vector<2x32xf32>, vector<32x96xf32>, vector<2x96xf32> -> vector<2x96xf32>
    %136 = vector.extract_strided_slice %132 {offsets = [0, 0], sizes = [2, 64], strides = [1, 1]} : vector<2x96xf32> to vector<2x64xf32>
    %137 = vector.extract_strided_slice %135 {offsets = [0, 0], sizes = [2, 64], strides = [1, 1]} : vector<2x96xf32> to vector<2x64xf32>
    %138 = arith.addf %136, %137 : vector<2x64xf32>
    %139 = arith.negf %138 : vector<2x64xf32>
    %140 = math.exp %139 : vector<2x64xf32>
    %cst_84 = arith.constant 1.000000e+00 : f32
    %141 = vector.broadcast %cst_84 : f32 to vector<2x64xf32>
    %142 = arith.addf %141, %140 : vector<2x64xf32>
    %143 = arith.divf %141, %142 : vector<2x64xf32>
    %144 = vector.extract_strided_slice %143 {offsets = [0, 0], sizes = [2, 32], strides = [1, 1]} : vector<2x64xf32> to vector<2x32xf32>
    %145 = vector.extract_strided_slice %143 {offsets = [0, 32], sizes = [2, 32], strides = [1, 1]} : vector<2x64xf32> to vector<2x32xf32>
    %146 = vector.extract_strided_slice %132 {offsets = [0, 64], sizes = [2, 32], strides = [1, 1]} : vector<2x96xf32> to vector<2x32xf32>
    %147 = vector.extract_strided_slice %135 {offsets = [0, 64], sizes = [2, 32], strides = [1, 1]} : vector<2x96xf32> to vector<2x32xf32>
    %c2_85 = arith.constant 2 : index
    %c0_86 = arith.constant 0 : index
    %c0_87 = arith.constant 0 : index
    %148 = vector.load %arg9[%c2_85, %c0_86, %c0_87] : memref<3x1x32xf32, #tpu.memory_space<vmem>>, vector<1x1x32xf32>
    %149 = vector.shape_cast %148 : vector<1x1x32xf32> to vector<1x32xf32>
    %150 = vector.broadcast %149 : vector<1x32xf32> to vector<2x32xf32>
    %151 = arith.addf %147, %150 : vector<2x32xf32>
    %152 = arith.mulf %144, %151 : vector<2x32xf32>
    %153 = arith.addf %146, %152 : vector<2x32xf32>
    %154 = math.tanh %153 : vector<2x32xf32>
    %cst_88 = arith.constant 1.000000e+00 : f32
    %155 = vector.broadcast %cst_88 : f32 to vector<2x32xf32>
    %156 = arith.subf %155, %145 : vector<2x32xf32>
    %157 = arith.mulf %156, %154 : vector<2x32xf32>
    %158 = arith.mulf %145, %125 : vector<2x32xf32>
    %159 = arith.addf %157, %158 : vector<2x32xf32>
    %c2_89 = arith.constant 2 : index
    %c0_90 = arith.constant 0 : index
    %c0_91 = arith.constant 0 : index
    %160 = vector.load %arg15[%c2_89, %c0_90, %c0_91] : memref<3x2x32xf32, #tpu.memory_space<vmem>>, vector<1x2x32xf32>
    %161 = vector.shape_cast %160 : vector<1x2x32xf32> to vector<2x32xf32>
    %162 = vector.shape_cast %159 : vector<2x32xf32> to vector<1x2x32xf32>
    tpu.vector_store %arg15[%c2_89, %c0_90, %c0_91], %162 {strides = array<i32>} : memref<3x2x32xf32, #tpu.memory_space<vmem>>, vector<1x2x32xf32>,
    %c0_92 = arith.constant 0 : index
    %c0_93 = arith.constant 0 : index
    %c0_94 = arith.constant 0 : index
    %163 = vector.load %arg10[%c0_92, %c0_93, %c0_94] : memref<3x32x128xf32, #tpu.memory_space<vmem>>, vector<1x32x128xf32>
    %164 = vector.shape_cast %163 : vector<1x32x128xf32> to vector<32x128xf32>
    %cst_95 = arith.constant dense<0.000000e+00> : vector<2x128xf32>
    %165 = tpu.matmul %81, %164, %cst_95 {dimension_numbers = #tpu.dot_dimension_numbers<[1], [0], [0], [1], [0, 0, 1, 1], [], []>} : vector<2x32xf32>, vector<32x128xf32>, vector<2x128xf32> -> vector<2x128xf32>
    %166 = vector.broadcast %5 : vector<1x128xf32> to vector<2x128xf32>
    %167 = arith.addf %166, %165 : vector<2x128xf32>
    %c1_96 = arith.constant 1 : index
    %c0_97 = arith.constant 0 : index
    %c0_98 = arith.constant 0 : index
    %168 = vector.load %arg10[%c1_96, %c0_97, %c0_98] : memref<3x32x128xf32, #tpu.memory_space<vmem>>, vector<1x32x128xf32>
    %169 = vector.shape_cast %168 : vector<1x32x128xf32> to vector<32x128xf32>
    %cst_99 = arith.constant dense<0.000000e+00> : vector<2x128xf32>
    %170 = tpu.matmul %120, %169, %cst_99 {dimension_numbers = #tpu.dot_dimension_numbers<[1], [0], [0], [1], [0, 0, 1, 1], [], []>} : vector<2x32xf32>, vector<32x128xf32>, vector<2x128xf32> -> vector<2x128xf32>
    %171 = arith.addf %167, %170 : vector<2x128xf32>
    %c2_100 = arith.constant 2 : index
    %c0_101 = arith.constant 0 : index
    %c0_102 = arith.constant 0 : index
    %172 = vector.load %arg10[%c2_100, %c0_101, %c0_102] : memref<3x32x128xf32, #tpu.memory_space<vmem>>, vector<1x32x128xf32>
    %173 = vector.shape_cast %172 : vector<1x32x128xf32> to vector<32x128xf32>
    %cst_103 = arith.constant dense<0.000000e+00> : vector<2x128xf32>
    %174 = tpu.matmul %159, %173, %cst_103 {dimension_numbers = #tpu.dot_dimension_numbers<[1], [0], [0], [1], [0, 0, 1, 1], [], []>} : vector<2x32xf32>, vector<32x128xf32>, vector<2x128xf32> -> vector<2x128xf32>
    %175 = arith.addf %171, %174 : vector<2x128xf32>
    %176 = arith.index_cast %7 : i32 to index
    %c0_104 = arith.constant 0 : index
    %c0_105 = arith.constant 0 : index
    %177 = vector.load %arg13[%176, %c0_104, %c0_105] : memref<1x2x128xf32, #tpu.memory_space<vmem>>, vector<1x2x128xf32>
    %178 = vector.shape_cast %177 : vector<1x2x128xf32> to vector<2x128xf32>
    %179 = vector.shape_cast %175 : vector<2x128xf32> to vector<1x2x128xf32>
    tpu.vector_store %arg13[%176, %c0_104, %c0_105], %179 {strides = array<i32>} : memref<1x2x128xf32, #tpu.memory_space<vmem>>, vector<1x2x128xf32>,
    %c1_i32_106 = arith.constant 1 : i32
    %c0_107 = arith.constant 0 : index
    %c0_108 = arith.constant 0 : index
    %c0_109 = arith.constant 0 : index
    %180 = vector.load %arg15[%c0_107, %c0_108, %c0_109] : memref<3x2x32xf32, #tpu.memory_space<vmem>>, vector<3x2x32xf32>
    %c0_110 = arith.constant 0 : index
    %c0_111 = arith.constant 0 : index
    %c0_112 = arith.constant 0 : index
    %181 = vector.load %arg14[%c0_110, %c0_111, %c0_112] : memref<3x2x32xf32, #tpu.memory_space<vmem>>, vector<3x2x32xf32>
    tpu.vector_store %arg14[%c0_110, %c0_111, %c0_112], %180 {strides = array<i32>} : memref<3x2x32xf32, #tpu.memory_space<vmem>>, vector<3x2x32xf32>,
    return
  }
  func.func @transform_0(%arg0: i32, %arg1: memref<1x2xi32, #tpu.memory_space<smem>>) -> (i32, i32, i32) {
    %c0_i32 = arith.constant 0 : i32
    %c0_i32_0 = arith.constant 0 : i32
    %c0_i32_1 = arith.constant 0 : i32
    %c0_i32_2 = arith.constant 0 : i32
    return %c0_i32, %c0_i32_0, %c0_i32_1 : i32, i32, i32
  }
  func.func @transform_1(%arg0: i32, %arg1: memref<1x2xi32, #tpu.memory_space<smem>>) -> (i32, i32) {
    %c0_i32 = arith.constant 0 : i32
    %c0_i32_0 = arith.constant 0 : i32
    %c0_i32_1 = arith.constant 0 : i32
    return %c0_i32, %c0_i32_0 : i32, i32
  }
  func.func @transform_2(%arg0: i32, %arg1: memref<1x2xi32, #tpu.memory_space<smem>>) -> (i32, i32) {
    %c0_i32 = arith.constant 0 : i32
    %c0_i32_0 = arith.constant 0 : i32
    %c0_i32_1 = arith.constant 0 : i32
    return %c0_i32, %c0_i32_0 : i32, i32
  }
  func.func @transform_3(%arg0: i32, %arg1: memref<1x2xi32, #tpu.memory_space<smem>>) -> (i32, i32) {
    %c0_i32 = arith.constant 0 : i32
    %c0_i32_0 = arith.constant 0 : i32
    %c0_i32_1 = arith.constant 0 : i32
    return %c0_i32, %c0_i32_0 : i32, i32
  }
  func.func @transform_4(%arg0: i32, %arg1: memref<1x2xi32, #tpu.memory_space<smem>>) -> (i32, i32, i32) {
    %c0_i32 = arith.constant 0 : i32
    %c0_i32_0 = arith.constant 0 : i32
    %c0_i32_1 = arith.constant 0 : i32
    %c0_i32_2 = arith.constant 0 : i32
    return %c0_i32, %c0_i32_0, %c0_i32_1 : i32, i32, i32
  }
  func.func @transform_5(%arg0: i32, %arg1: memref<1x2xi32, #tpu.memory_space<smem>>) -> (i32, i32, i32) {
    %c0_i32 = arith.constant 0 : i32
    %c0_i32_0 = arith.constant 0 : i32
    %c0_i32_1 = arith.constant 0 : i32
    %c0_i32_2 = arith.constant 0 : i32
    return %c0_i32, %c0_i32_0, %c0_i32_1 : i32, i32, i32
  }
  func.func @transform_6(%arg0: i32, %arg1: memref<1x2xi32, #tpu.memory_space<smem>>) -> (i32, i32, i32) {
    %c0_i32 = arith.constant 0 : i32
    %c0_i32_0 = arith.constant 0 : i32
    %c0_i32_1 = arith.constant 0 : i32
    %c0_i32_2 = arith.constant 0 : i32
    return %c0_i32, %c0_i32_0, %c0_i32_1 : i32, i32, i32
  }
  func.func @transform_7(%arg0: i32, %arg1: memref<1x2xi32, #tpu.memory_space<smem>>) -> (i32, i32, i32) {
    %c0_i32 = arith.constant 0 : i32
    %c0_i32_0 = arith.constant 0 : i32
    %c0_i32_1 = arith.constant 0 : i32
    %c0_i32_2 = arith.constant 0 : i32
    return %c0_i32, %c0_i32_0, %c0_i32_1 : i32, i32, i32
  }
  func.func @transform_8(%arg0: i32, %arg1: memref<1x2xi32, #tpu.memory_space<smem>>) -> (i32, i32, i32) {
    %c0_i32 = arith.constant 0 : i32
    %c0_i32_0 = arith.constant 0 : i32
    %c0_i32_1 = arith.constant 0 : i32
    %c0_i32_2 = arith.constant 0 : i32
    return %c0_i32, %c0_i32_0, %c0_i32_1 : i32, i32, i32
  }
  func.func @transform_9(%arg0: i32, %arg1: memref<1x2xi32, #tpu.memory_space<smem>>) -> (i32, i32) {
    %c0_i32 = arith.constant 0 : i32
    %c0_i32_0 = arith.constant 0 : i32
    %c0_i32_1 = arith.constant 0 : i32
    return %c0_i32, %c0_i32_0 : i32, i32
  }
  func.func @transform_10(%arg0: i32, %arg1: memref<1x2xi32, #tpu.memory_space<smem>>) -> (i32, i32, i32) {
    %c0_i32 = arith.constant 0 : i32
    %c0_i32_0 = arith.constant 0 : i32
    %c0_i32_1 = arith.constant 0 : i32
    %c0_i32_2 = arith.constant 0 : i32
    return %c0_i32, %c0_i32_0, %c0_i32_1 : i32, i32, i32
  }
  func.func @transform_11(%arg0: i32, %arg1: memref<1x2xi32, #tpu.memory_space<smem>>) -> (i32, i32, i32) {
    %c0_i32 = arith.constant 0 : i32
    %c0_i32_0 = arith.constant 0 : i32
    %c0_i32_1 = arith.constant 0 : i32
    %c0_i32_2 = arith.constant 0 : i32
    return %c0_i32, %c0_i32_0, %c0_i32_1 : i32, i32, i32
  }
  func.func @transform_12(%arg0: i32, %arg1: memref<1x2xi32, #tpu.memory_space<smem>>) -> (i32, i32, i32) {
    %c0_i32 = arith.constant 0 : i32
    %c0_i32_0 = arith.constant 0 : i32
    %c0_i32_1 = arith.constant 0 : i32
    %c0_i32_2 = arith.constant 0 : i32
    return %c0_i32, %c0_i32_0, %c0_i32_1 : i32, i32, i32
  }
}

</mosaic_0001>

<llo_original>
// kernel: performance_rnn_forward_seq.1
$region0: #{performance_rnn_forward_seq.1}
  #allocation0 [shape = 'u32[]', space=smem, size = 0x4, offset = 0x4, fixed_abs, tag = 'smem constant byte address 0x4 - core index']
  #allocation1 [shape = 'u32[144,128]{1,0:T(1,128)}', space=vmem, size = 0x12000, scoped, tag = 'internal scratch']
  #allocation2 [shape = 'f32[3,2,32]{2,1,0:T(2,128)}', space=vmem, size = 0xc00, scoped, tag = 'scratch operand']
  #allocation3 [shape = 's32[1]{0}', space=sflag, size = 0x4, scoped, tag = 'scoped memory for performance_rnn_forward_seq.1']
  #allocation4 [shape = 'u8[512]{0}', space=smem, size = 0x200, scoped, tag = 'prefetched SMEM operand 0']
  %s0 = inlined_call_operand.vmem [shape: s32[1,2], index: 0, kind: input, shape index: {}]
  %s1 = inlined_call_operand.vmem [shape: f32[1,2,8], index: 1, kind: input, shape index: {}]
  %s2 = inlined_call_operand.hbm [shape: f32[16,32], index: 2, kind: input, shape index: {}]
  %s3 = inlined_call_operand.vmem [shape: f32[8,32], index: 3, kind: input, shape index: {}]
  %s4 = inlined_call_operand.hbm [shape: f32[1,32], index: 4, kind: input, shape index: {}]
  %s5 = inlined_call_operand.hbm [shape: f32[3,32,96], index: 5, kind: input, shape index: {}]
  %s6 = inlined_call_operand.hbm [shape: f32[3,32,96], index: 6, kind: input, shape index: {}]
  %s7 = inlined_call_operand.hbm [shape: f32[3,1,96], index: 7, kind: input, shape index: {}]
  %s8 = inlined_call_operand.hbm [shape: f32[3,1,32], index: 8, kind: input, shape index: {}]
  %s9 = inlined_call_operand.hbm [shape: f32[3,32,128], index: 9, kind: input, shape index: {}]
  %s10 = inlined_call_operand.vmem [shape: f32[1,128], index: 10, kind: input, shape index: {}]
  %s11 = inlined_call_operand.vmem [shape: f32[3,2,32], index: 11, kind: input, shape index: {}]
  %s12 = inlined_call_operand.hbm [shape: f32[1,2,128], index: 12, kind: output, shape index: {0}]
  %s13 = inlined_call_operand.hbm [shape: f32[3,2,32], index: 13, kind: output, shape index: {1}]
  %14 = xla_tuple %s12, %s13
  %s15 = sld [smem:[#allocation0]]
  $region90: #{performance_rnn_forward_seq.1} parent=0
    _
  %s17 = ssub.s32 1, %s15
  %s18 = scalar_select 0, %s17, %s15
  %s19 = sshll.u32 %s0, 4
  %s20 = int_to_ptr.vmem [resolvable:$true] %s19
  %22 = dma.vmem_to_smem %s20, 16, [#allocation4], [#allocation3]
  %23 = dma.done [#allocation3], 16
  %24 = sfence
  $region1: #{performance_rnn_forward_seq.1} parent=0
    #allocation5 [shape = 'u8[8192]{0}', space=vmem, size = 0x2000, scoped, tag = 'input window, operand 2, single buffered']
    #allocation6 [shape = 's32[1]{0}', space=sflag, size = 0x4, scoped, tag = 'scoped memory for performance_rnn_forward_seq.1']
    #allocation7 [shape = 's32[1]{0}', space=sflag, size = 0x4, scoped, tag = 'scoped memory for performance_rnn_forward_seq.1']
    #allocation8 [shape = 'u8[512]{0}', space=vmem, size = 0x400, scoped, tag = 'input window, operand 4, single buffered']
    #allocation9 [shape = 's32[1]{0}', space=sflag, size = 0x4, scoped, tag = 'scoped memory for performance_rnn_forward_seq.1']
    #allocation10 [shape = 'u8[49152]{0}', space=vmem, size = 0xc000, scoped, tag = 'input window, operand 5, single buffered']
    #allocation11 [shape = 'u8[49152]{0}', space=vmem, size = 0xc000, scoped, tag = 'input window, operand 6, single buffered']
    #allocation12 [shape = 's32[1]{0}', space=sflag, size = 0x4, scoped, tag = 'scoped memory for performance_rnn_forward_seq.1']
    #allocation13 [shape = 'u8[1536]{0}', space=vmem, size = 0x800, scoped, tag = 'input window, operand 7, single buffered']
    #allocation14 [shape = 'u8[1536]{0}', space=vmem, size = 0x800, scoped, tag = 'input window, operand 8, single buffered']
    #allocation15 [shape = 's32[1]{0}', space=sflag, size = 0x4, scoped, tag = 'scoped memory for performance_rnn_forward_seq.1']
    #allocation16 [shape = 'u8[49152]{0}', space=vmem, size = 0xc000, scoped, tag = 'input window, operand 9, single buffered']
    #allocation17 [shape = 'u8[1024]{0}', space=vmem, size = 0x400, scoped, tag = 'output window, operand 0, single buffered']
    #allocation18 [shape = 'u8[3072]{0}', space=vmem, size = 0xc00, scoped, tag = 'output window, operand 1, single buffered']
    #allocation19 [shape = 's32[1]{0}', space=sflag, size = 0x4, scoped, tag = 'scoped memory for performance_rnn_forward_seq.1']
    %25 = vsyncpa [#allocation6], 0
    %26 = vsyncpa [#allocation9], 0
    %27 = vsyncpa [#allocation12], 0
    %28 = vsyncpa [#allocation15], 0
    %29 = vsyncpa [#allocation7], 0
    %30 = vsyncpa [#allocation19], 0
    // Predicated region
    $region2: #{performance_rnn_forward_seq.1} parent=1 // pred_check
      _
    $region3: #{performance_rnn_forward_seq.1} parent=1 // pred_check_branch
      %32 = sbr.rel (0) target = $region5
    $region4: #{performance_rnn_forward_seq.1} parent=1 // pred_region
      _
    $region5: #{performance_rnn_forward_seq.1} parent=1 // pred_fallthru
      _
    // Predicated region
    $region6: #{performance_rnn_forward_seq.1} parent=1 // pred_check
      _
    $region7: #{performance_rnn_forward_seq.1} parent=1 // pred_check_branch
      %34 = sbr.rel (0) target = $region9
    $region8: #{performance_rnn_forward_seq.1} parent=1 // pred_region
      %s36 = ssub.s32 256, 256
      %37 = vsyncadd [#allocation6], %s36
      %s38 = sshll.u32 [#allocation5], 4
      %s39 = int_to_ptr.vmem [resolvable:$true] %s38
      %44 = dma.hbm_to_vmem [thread:$0]  %s2, 256, %s39, [#allocation6], 128, 128, 8
    $region9: #{performance_rnn_forward_seq.1} parent=1 // pred_fallthru
      _
    // Predicated region
    $region10: #{performance_rnn_forward_seq.1} parent=1 // pred_check
      _
    $region11: #{performance_rnn_forward_seq.1} parent=1 // pred_check_branch
      %46 = sbr.rel (0) target = $region13
    $region12: #{performance_rnn_forward_seq.1} parent=1 // pred_region
      _
    $region13: #{performance_rnn_forward_seq.1} parent=1 // pred_fallthru
      _
    // Predicated region
    $region14: #{performance_rnn_forward_seq.1} parent=1 // pred_check
      _
    $region15: #{performance_rnn_forward_seq.1} parent=1 // pred_check_branch
      %48 = sbr.rel (0) target = $region17
    $region16: #{performance_rnn_forward_seq.1} parent=1 // pred_region
      %s50 = ssub.s32 16, 16
      %51 = vsyncadd [#allocation9], %s50
      %s53 = sshll.u32 [#allocation8], 4
      %s54 = int_to_ptr.vmem [resolvable:$true] %s53
      %56 = dma.hbm_to_vmem [thread:$0]  %s4, 16, %s54, [#allocation9]
    $region17: #{performance_rnn_forward_seq.1} parent=1 // pred_fallthru
      _
    // Predicated region
    $region18: #{performance_rnn_forward_seq.1} parent=1 // pred_check
      _
    $region19: #{performance_rnn_forward_seq.1} parent=1 // pred_check_branch
      %58 = sbr.rel (0) target = $region21
    $region20: #{performance_rnn_forward_seq.1} parent=1 // pred_region
      %s60 = ssub.s32 1536, 1536
      %61 = vsyncadd [#allocation9], %s60
      %s62 = sshll.u32 [#allocation10], 4
      %s63 = int_to_ptr.vmem [resolvable:$true] %s62
      %68 = dma.hbm_to_vmem [thread:$0]  %s5, 1536, %s63, [#allocation9], 128, 128, 8
    $region21: #{performance_rnn_forward_seq.1} parent=1 // pred_fallthru
      _
    // Predicated region
    $region22: #{performance_rnn_forward_seq.1} parent=1 // pred_check
      _
    $region23: #{performance_rnn_forward_seq.1} parent=1 // pred_check_branch
      %70 = sbr.rel (0) target = $region25
    $region24: #{performance_rnn_forward_seq.1} parent=1 // pred_region
      %s72 = ssub.s32 1536, 1536
      %73 = vsyncadd [#allocation12], %s72
      %s74 = sshll.u32 [#allocation11], 4
      %s75 = int_to_ptr.vmem [resolvable:$true] %s74
      %80 = dma.hbm_to_vmem [thread:$0]  %s6, 1536, %s75, [#allocation12], 128, 128, 8
    $region25: #{performance_rnn_forward_seq.1} parent=1 // pred_fallthru
      _
    // Predicated region
    $region26: #{performance_rnn_forward_seq.1} parent=1 // pred_check
      _
    $region27: #{performance_rnn_forward_seq.1} parent=1 // pred_check_branch
      %82 = sbr.rel (0) target = $region29
    $region28: #{performance_rnn_forward_seq.1} parent=1 // pred_region
      %s84 = ssub.s32 48, 48
      %85 = vsyncadd [#allocation12], %s84
      %s86 = sshll.u32 [#allocation13], 4
      %s87 = int_to_ptr.vmem [resolvable:$true] %s86
      %92 = dma.hbm_to_vmem [thread:$0]  %s7, 48, %s87, [#allocation12], 16, 16, 1
    $region29: #{performance_rnn_forward_seq.1} parent=1 // pred_fallthru
      _
    // Predicated region
    $region30: #{performance_rnn_forward_seq.1} parent=1 // pred_check
      _
    $region31: #{performance_rnn_forward_seq.1} parent=1 // pred_check_branch
      %94 = sbr.rel (0) target = $region33
    $region32: #{performance_rnn_forward_seq.1} parent=1 // pred_region
      %s96 = ssub.s32 48, 48
      %97 = vsyncadd [#allocation15], %s96
      %s98 = sshll.u32 [#allocation14], 4
      %s99 = int_to_ptr.vmem [resolvable:$true] %s98
      %104 = dma.hbm_to_vmem [thread:$0]  %s8, 48, %s99, [#allocation15], 16, 16, 1
    $region33: #{performance_rnn_forward_seq.1} parent=1 // pred_fallthru
      _
    // Predicated region
    $region34: #{performance_rnn_forward_seq.1} parent=1 // pred_check
      _
    $region35: #{performance_rnn_forward_seq.1} parent=1 // pred_check_branch
      %106 = sbr.rel (0) target = $region37
    $region36: #{performance_rnn_forward_seq.1} parent=1 // pred_region
      %s108 = ssub.s32 1536, 1536
      %109 = vsyncadd [#allocation15], %s108
      %s110 = sshll.u32 [#allocation16], 4
      %s111 = int_to_ptr.vmem [resolvable:$true] %s110
      %116 = dma.hbm_to_vmem [thread:$0]  %s9, 1536, %s111, [#allocation15], 128, 128, 8
    $region37: #{performance_rnn_forward_seq.1} parent=1 // pred_fallthru
      _
    // Predicated region
    $region38: #{performance_rnn_forward_seq.1} parent=1 // pred_check
      _
    $region39: #{performance_rnn_forward_seq.1} parent=1 // pred_check_branch
      %118 = sbr.rel (0) target = $region41
    $region40: #{performance_rnn_forward_seq.1} parent=1 // pred_region
      _
    $region41: #{performance_rnn_forward_seq.1} parent=1 // pred_fallthru
      _
    // Predicated region
    $region42: #{performance_rnn_forward_seq.1} parent=1 // pred_check
      _
    $region43: #{performance_rnn_forward_seq.1} parent=1 // pred_check_branch
      %120 = sbr.rel (0) target = $region45
    $region44: #{performance_rnn_forward_seq.1} parent=1 // pred_region
      _
    $region45: #{performance_rnn_forward_seq.1} parent=1 // pred_fallthru
      _
    // Predicated region
    $region46: #{performance_rnn_forward_seq.1} parent=1 // pred_check
      _
    $region47: #{performance_rnn_forward_seq.1} parent=1 // pred_check_branch
      %122 = sbr.rel (0) target = $region49
    $region48: #{performance_rnn_forward_seq.1} parent=1 // pred_region
      %123 = dma.done [#allocation6], 256
    $region49: #{performance_rnn_forward_seq.1} parent=1 // pred_fallthru
      _
    // Predicated region
    $region50: #{performance_rnn_forward_seq.1} parent=1 // pred_check
      _
    $region51: #{performance_rnn_forward_seq.1} parent=1 // pred_check_branch
      %125 = sbr.rel (0) target = $region53
    $region52: #{performance_rnn_forward_seq.1} parent=1 // pred_region
      %126 = dma.done [#allocation9], 16
    $region53: #{performance_rnn_forward_seq.1} parent=1 // pred_fallthru
      _
    // Predicated region
    $region54: #{performance_rnn_forward_seq.1} parent=1 // pred_check
      _
    $region55: #{performance_rnn_forward_seq.1} parent=1 // pred_check_branch
      %128 = sbr.rel (0) target = $region57
    $region56: #{performance_rnn_forward_seq.1} parent=1 // pred_region
      %129 = dma.done [#allocation9], 1536
    $region57: #{performance_rnn_forward_seq.1} parent=1 // pred_fallthru
      _
    // Predicated region
    $region58: #{performance_rnn_forward_seq.1} parent=1 // pred_check
      _
    $region59: #{performance_rnn_forward_seq.1} parent=1 // pred_check_branch
      %131 = sbr.rel (0) target = $region61
    $region60: #{performance_rnn_forward_seq.1} parent=1 // pred_region
      %132 = dma.done [#allocation12], 1536
    $region61: #{performance_rnn_forward_seq.1} parent=1 // pred_fallthru
      _
    // Predicated region
    $region62: #{performance_rnn_forward_seq.1} parent=1 // pred_check
      _
    $region63: #{performance_rnn_forward_seq.1} parent=1 // pred_check_branch
      %134 = sbr.rel (0) target = $region65
    $region64: #{performance_rnn_forward_seq.1} parent=1 // pred_region
      %135 = dma.done [#allocation12], 48
    $region65: #{performance_rnn_forward_seq.1} parent=1 // pred_fallthru
      _
    // Predicated region
    $region66: #{performance_rnn_forward_seq.1} parent=1 // pred_check
      _
    $region67: #{performance_rnn_forward_seq.1} parent=1 // pred_check_branch
      %137 = sbr.rel (0) target = $region69
    $region68: #{performance_rnn_forward_seq.1} parent=1 // pred_region
      %138 = dma.done [#allocation15], 48
    $region69: #{performance_rnn_forward_seq.1} parent=1 // pred_fallthru
      _
    // Predicated region
    $region70: #{performance_rnn_forward_seq.1} parent=1 // pred_check
      _
    $region71: #{performance_rnn_forward_seq.1} parent=1 // pred_check_branch
      %140 = sbr.rel (0) target = $region73
    $region72: #{performance_rnn_forward_seq.1} parent=1 // pred_region
      %141 = dma.done [#allocation15], 1536
    $region73: #{performance_rnn_forward_seq.1} parent=1 // pred_fallthru
      _
    %v142 = vld [vmem:[%s11] sm:$0x3]
    %v143 = vld [vmem:[%s11 + $0x2] sm:$0x3]
    %v144 = vld [vmem:[%s11 + $0x4] sm:$0x3]
    %vm145 = vcmask 254976
    %146 = vst.msk [vmem:[#allocation2] sm:$0x3] %vm145, %v142
    %147 = vst.msk [vmem:[#allocation2 + $0x2] sm:$0x3] %vm145, %v143
    %148 = vst.msk [vmem:[#allocation2 + $0x4] sm:$0x3] %vm145, %v144
    %v149 = vlaneseq
    %v150 = vshrl.u32 %v149, 7
    %v151 = vlaneseq
    %v152 = vand.u32 %v151, 127
    %v153 = vld [vmem:[#allocation8] sm:$0x1]
    %v154 = vld [vmem:[%s10] sm:$0x1]
    %s155 = sld [smem:[#allocation4]]
    %vm156 = vcmp.eq.s32.totalorder %v150, 0
    %v157 = vstv %s155
    %vm158 = vcmp.eq.s32.totalorder %v152, %v157
    %vm159 = vmand %vm156, %vm158
    %v160 = vsel %vm159, 1.0, 0.0
    %v161 = vadd.f32 %v160, 0.0
    %s162 = sld [smem:[#allocation4 + $0x1]]
    %vm163 = vcmp.eq.s32.totalorder %v150, 1
    %v164 = vstv %s162
    %vm165 = vcmp.eq.s32.totalorder %v152, %v164
    %vm166 = vmand %vm163, %vm165
    %v167 = vsel %vm166, 1.0, 0.0
    %v168 = vadd.f32 %v161, %v167
    %v169 = vld [vmem:[#allocation5] sm:$0xff]
    %v170 = vld [vmem:[#allocation5 + $0x8] sm:$0xff]
    %v171 = vld [vmem:[%s1] sm:$0x3]
    %v172 = vld [vmem:[%s3] sm:$0xff]
    %vm173 = vcmask 64512
    %v175 = vsel %vm173, %v171, 0
    %177 = vmatprep.subr.mxu0 0.0
    %178 = vmatpush1.msra.mxu0 %v172
    %179 = vmatprep.subr.mxu0 0.0
    %180 = vmatpush1.msra.mxu0 0.0
    %181 = vmatprep.subr.mxu0 0.0
    %182 = vmatpush1.msra.mxu0 0.0
    %183 = vmatprep.subr.mxu0 0.0
    %184 = vmatpush1.msra.mxu0 0.0
    %185 = vmatprep.subr.mxu0 0.0
    %186 = vmatpush1.msra.mxu0 0.0
    %187 = vmatprep.subr.mxu0 0.0
    %188 = vmatpush1.msra.mxu0 0.0
    %189 = vmatprep.subr.mxu0 0.0
    %190 = vmatpush1.msra.mxu0 0.0
    %191 = vmatprep.subr.mxu0 0.0
    %192 = vmatpush1.msra.mxu0 0.0
    %193 = vmatprep.subr.mxu0 0.0
    %194 = vmatpush1.msra.mxu0 0.0
    %195 = vmatprep.subr.mxu0 0.0
    %196 = vmatpush1.msra.mxu0 0.0
    %197 = vmatprep.subr.mxu0 0.0
    %198 = vmatpush1.msra.mxu0 0.0
    %199 = vmatprep.subr.mxu0 0.0
    %200 = vmatpush1.msra.mxu0 0.0
    %201 = vmatprep.subr.mxu0 0.0
    %202 = vmatpush1.msra.mxu0 0.0
    %203 = vmatprep.subr.mxu0 0.0
    %204 = vmatpush1.msra.mxu0 0.0
    %205 = vmatprep.subr.mxu0 0.0
    %206 = vmatpush1.msra.mxu0 0.0
    %207 = vmatprep.subr.mxu0 0.0
    %208 = vmatpush1.msra.mxu0 0.0
    %209 = vmatprep.subr.mxu0 0.0
    %210 = vmatpush1.msra.mxu0 0.0
    %211 = vmatprep.subr.mxu0 0.0
    %212 = vmatpush1.msra.mxu0 0.0
    %213 = vmatprep.subr.mxu0 0.0
    %214 = vmatpush1.msra.mxu0 0.0
    %215 = vmatprep.subr.mxu0 0.0
    %216 = vmatpush1.msra.mxu0 0.0
    %217 = vmatprep.subr.mxu0 0.0
    %218 = vmatpush1.msra.mxu0 0.0
    %219 = vmatprep.subr.mxu0 0.0
    %220 = vmatpush1.msra.mxu0 0.0
    %221 = vmatprep.subr.mxu0 0.0
    %222 = vmatpush1.msra.mxu0 0.0
    %223 = vmatprep.subr.mxu0 0.0
    %224 = vmatpush1.msra.mxu0 0.0
    %225 = vmatprep.subr.mxu0 0.0
    %226 = vmatpush1.msra.mxu0 0.0
    %227 = vmatprep.subr.mxu0 0.0
    %228 = vmatpush1.msra.mxu0 0.0
    %229 = vmatprep.subr.mxu0 0.0
    %230 = vmatpush1.msra.mxu0 0.0
    %231 = vmatprep.subr.mxu0 0.0
    %232 = vmatpush1.msra.mxu0 0.0
    %233 = vmatprep.subr.mxu0 0.0
    %234 = vmatpush1.msra.mxu0 0.0
    %235 = vmatprep.subr.mxu0 0.0
    %236 = vmatpush1.msra.mxu0 0.0
    %237 = vmatprep.subr.mxu0 0.0
    %238 = vmatpush1.msra.mxu0 0.0
    %239 = vmatprep.subr.mxu0 0.0
    %240 = vmatpush1.msra.mxu0 0.0
    %241 = vmatprep.mubr.f32.mxu0 0.0
    %242 = vmatmul.mubr.f32.gmra.mrb[0].mxu0 %v175
    %v243 = vpop.f32.mrb[0].mxu0
    %v244 = vadd.f32 0.0, %v243
    %v245 = vpop.f32.mrb[0].mxu0
    %246 = vdwg.mxu0
    %vm247 = vcmask 130048
    %v249 = vsel %vm247, %v168, 0
    %251 = vmatprep.subr.mxu0 0.0
    %252 = vmatpush1.msra.mxu0 %v169
    %253 = vmatprep.subr.mxu0 0.0
    %254 = vmatpush1.msra.mxu0 %v170
    %255 = vmatprep.subr.mxu0 0.0
    %256 = vmatpush1.msra.mxu0 0.0
    %257 = vmatprep.subr.mxu0 0.0
    %258 = vmatpush1.msra.mxu0 0.0
    %259 = vmatprep.subr.mxu0 0.0
    %260 = vmatpush1.msra.mxu0 0.0
    %261 = vmatprep.subr.mxu0 0.0
    %262 = vmatpush1.msra.mxu0 0.0
    %263 = vmatprep.subr.mxu0 0.0
    %264 = vmatpush1.msra.mxu0 0.0
    %265 = vmatprep.subr.mxu0 0.0
    %266 = vmatpush1.msra.mxu0 0.0
    %267 = vmatprep.subr.mxu0 0.0
    %268 = vmatpush1.msra.mxu0 0.0
    %269 = vmatprep.subr.mxu0 0.0
    %270 = vmatpush1.msra.mxu0 0.0
    %271 = vmatprep.subr.mxu0 0.0
    %272 = vmatpush1.msra.mxu0 0.0
    %273 = vmatprep.subr.mxu0 0.0
    %274 = vmatpush1.msra.mxu0 0.0
    %275 = vmatprep.subr.mxu0 0.0
    %276 = vmatpush1.msra.mxu0 0.0
    %277 = vmatprep.subr.mxu0 0.0
    %278 = vmatpush1.msra.mxu0 0.0
    %279 = vmatprep.subr.mxu0 0.0
    %280 = vmatpush1.msra.mxu0 0.0
    %281 = vmatprep.subr.mxu0 0.0
    %282 = vmatpush1.msra.mxu0 0.0
    %283 = vmatprep.subr.mxu0 0.0
    %284 = vmatpush1.msra.mxu0 0.0
    %285 = vmatprep.subr.mxu0 0.0
    %286 = vmatpush1.msra.mxu0 0.0
    %287 = vmatprep.subr.mxu0 0.0
    %288 = vmatpush1.msra.mxu0 0.0
    %289 = vmatprep.subr.mxu0 0.0
    %290 = vmatpush1.msra.mxu0 0.0
    %291 = vmatprep.subr.mxu0 0.0
    %292 = vmatpush1.msra.mxu0 0.0
    %293 = vmatprep.subr.mxu0 0.0
    %294 = vmatpush1.msra.mxu0 0.0
    %295 = vmatprep.subr.mxu0 0.0
    %296 = vmatpush1.msra.mxu0 0.0
    %297 = vmatprep.subr.mxu0 0.0
    %298 = vmatpush1.msra.mxu0 0.0
    %299 = vmatprep.subr.mxu0 0.0
    %300 = vmatpush1.msra.mxu0 0.0
    %301 = vmatprep.subr.mxu0 0.0
    %302 = vmatpush1.msra.mxu0 0.0
    %303 = vmatprep.subr.mxu0 0.0
    %304 = vmatpush1.msra.mxu0 0.0
    %305 = vmatprep.subr.mxu0 0.0
    %306 = vmatpush1.msra.mxu0 0.0
    %307 = vmatprep.subr.mxu0 0.0
    %308 = vmatpush1.msra.mxu0 0.0
    %309 = vmatprep.subr.mxu0 0.0
    %310 = vmatpush1.msra.mxu0 0.0
    %311 = vmatprep.subr.mxu0 0.0
    %312 = vmatpush1.msra.mxu0 0.0
    %313 = vmatprep.subr.mxu0 0.0
    %314 = vmatpush1.msra.mxu0 0.0
    %315 = vmatprep.mubr.f32.mxu0 0.0
    %316 = vmatmul.mubr.f32.gmra.mrb[0].mxu0 %v249
    %v317 = vpop.f32.mrb[0].mxu0
    %v318 = vadd.f32 %v244, %v317
    %v319 = vpop.f32.mrb[0].mxu0
    %320 = vdwg.mxu0
    %v322 = vlaneseq
    %v323 = vshrl.u32 %v322, 7
    %v324 = vsub.s32 0, %v323
    %v325 = vrot.slane %v153, %v324
    %v327 = vadd.f32 %v318, %v325
    %vm328 = vcmp.ge.f32.partialorder %v327, 0.0
    %v329 = vmul.f32 %v327, 0.1
    %v330 = vsel %vm328, %v327, %v329
    %v331 = vld [vmem:[#allocation2] sm:$0x3]
    %v332 = vld [vmem:[#allocation10] sm:$0xff]
    %v333 = vld [vmem:[#allocation10 + $0x8] sm:$0xff]
    %v334 = vld [vmem:[#allocation10 + $0x10] sm:$0xff]
    %v335 = vld [vmem:[#allocation10 + $0x18] sm:$0xff]
    %v336 = vld [vmem:[#allocation13] sm:$0x1]
    %v338 = vlaneseq
    %v339 = vshrl.u32 %v338, 7
    %v340 = vsub.s32 0, %v339
    %v341 = vrot.slane %v336, %v340
    %vm343 = vcmask 261120
    %v345 = vsel %vm343, %v330, 0
    %347 = vmatprep.subr.mxu0 0.0
    %348 = vmatpush1.msra.mxu0 %v332
    %349 = vmatprep.subr.mxu0 0.0
    %350 = vmatpush1.msra.mxu0 %v333
    %351 = vmatprep.subr.mxu0 0.0
    %352 = vmatpush1.msra.mxu0 %v334
    %353 = vmatprep.subr.mxu0 0.0
    %354 = vmatpush1.msra.mxu0 %v335
    %355 = vmatprep.subr.mxu0 0.0
    %356 = vmatpush1.msra.mxu0 0.0
    %357 = vmatprep.subr.mxu0 0.0
    %358 = vmatpush1.msra.mxu0 0.0
    %359 = vmatprep.subr.mxu0 0.0
    %360 = vmatpush1.msra.mxu0 0.0
    %361 = vmatprep.subr.mxu0 0.0
    %362 = vmatpush1.msra.mxu0 0.0
    %363 = vmatprep.subr.mxu0 0.0
    %364 = vmatpush1.msra.mxu0 0.0
    %365 = vmatprep.subr.mxu0 0.0
    %366 = vmatpush1.msra.mxu0 0.0
    %367 = vmatprep.subr.mxu0 0.0
    %368 = vmatpush1.msra.mxu0 0.0
    %369 = vmatprep.subr.mxu0 0.0
    %370 = vmatpush1.msra.mxu0 0.0
    %371 = vmatprep.subr.mxu0 0.0
    %372 = vmatpush1.msra.mxu0 0.0
    %373 = vmatprep.subr.mxu0 0.0
    %374 = vmatpush1.msra.mxu0 0.0
    %375 = vmatprep.subr.mxu0 0.0
    %376 = vmatpush1.msra.mxu0 0.0
    %377 = vmatprep.subr.mxu0 0.0
    %378 = vmatpush1.msra.mxu0 0.0
    %379 = vmatprep.subr.mxu0 0.0
    %380 = vmatpush1.msra.mxu0 0.0
    %381 = vmatprep.subr.mxu0 0.0
    %382 = vmatpush1.msra.mxu0 0.0
    %383 = vmatprep.subr.mxu0 0.0
    %384 = vmatpush1.msra.mxu0 0.0
    %385 = vmatprep.subr.mxu0 0.0
    %386 = vmatpush1.msra.mxu0 0.0
    %387 = vmatprep.subr.mxu0 0.0
    %388 = vmatpush1.msra.mxu0 0.0
    %389 = vmatprep.subr.mxu0 0.0
    %390 = vmatpush1.msra.mxu0 0.0
    %391 = vmatprep.subr.mxu0 0.0
    %392 = vmatpush1.msra.mxu0 0.0
    %393 = vmatprep.subr.mxu0 0.0
    %394 = vmatpush1.msra.mxu0 0.0
    %395 = vmatprep.subr.mxu0 0.0
    %396 = vmatpush1.msra.mxu0 0.0
    %397 = vmatprep.subr.mxu0 0.0
    %398 = vmatpush1.msra.mxu0 0.0
    %399 = vmatprep.subr.mxu0 0.0
    %400 = vmatpush1.msra.mxu0 0.0
    %401 = vmatprep.subr.mxu0 0.0
    %402 = vmatpush1.msra.mxu0 0.0
    %403 = vmatprep.subr.mxu0 0.0
    %404 = vmatpush1.msra.mxu0 0.0
    %405 = vmatprep.subr.mxu0 0.0
    %406 = vmatpush1.msra.mxu0 0.0
    %407 = vmatprep.subr.mxu0 0.0
    %408 = vmatpush1.msra.mxu0 0.0
    %409 = vmatprep.subr.mxu0 0.0
    %410 = vmatpush1.msra.mxu0 0.0
    %411 = vmatprep.mubr.f32.mxu0 0.0
    %412 = vmatmul.mubr.f32.gmra.mrb[0].mxu0 %v345
    %v413 = vpop.f32.mrb[0].mxu0
    %v414 = vadd.f32 %v341, %v413
    %v415 = vpop.f32.mrb[0].mxu0
    %416 = vdwg.mxu0
    %v417 = vld [vmem:[#allocation11] sm:$0xff]
    %v418 = vld [vmem:[#allocation11 + $0x8] sm:$0xff]
    %v419 = vld [vmem:[#allocation11 + $0x10] sm:$0xff]
    %v420 = vld [vmem:[#allocation11 + $0x18] sm:$0xff]
    %v422 = vsel %vm343, %v331, 0
    %424 = vmatprep.subr.mxu0 0.0
    %425 = vmatpush1.msra.mxu0 %v417
    %426 = vmatprep.subr.mxu0 0.0
    %427 = vmatpush1.msra.mxu0 %v418
    %428 = vmatprep.subr.mxu0 0.0
    %429 = vmatpush1.msra.mxu0 %v419
    %430 = vmatprep.subr.mxu0 0.0
    %431 = vmatpush1.msra.mxu0 %v420
    %432 = vmatprep.subr.mxu0 0.0
    %433 = vmatpush1.msra.mxu0 0.0
    %434 = vmatprep.subr.mxu0 0.0
    %435 = vmatpush1.msra.mxu0 0.0
    %436 = vmatprep.subr.mxu0 0.0
    %437 = vmatpush1.msra.mxu0 0.0
    %438 = vmatprep.subr.mxu0 0.0
    %439 = vmatpush1.msra.mxu0 0.0
    %440 = vmatprep.subr.mxu0 0.0
    %441 = vmatpush1.msra.mxu0 0.0
    %442 = vmatprep.subr.mxu0 0.0
    %443 = vmatpush1.msra.mxu0 0.0
    %444 = vmatprep.subr.mxu0 0.0
    %445 = vmatpush1.msra.mxu0 0.0
    %446 = vmatprep.subr.mxu0 0.0
    %447 = vmatpush1.msra.mxu0 0.0
    %448 = vmatprep.subr.mxu0 0.0
    %449 = vmatpush1.msra.mxu0 0.0
    %450 = vmatprep.subr.mxu0 0.0
    %451 = vmatpush1.msra.mxu0 0.0
    %452 = vmatprep.subr.mxu0 0.0
    %453 = vmatpush1.msra.mxu0 0.0
    %454 = vmatprep.subr.mxu0 0.0
    %455 = vmatpush1.msra.mxu0 0.0
    %456 = vmatprep.subr.mxu0 0.0
    %457 = vmatpush1.msra.mxu0 0.0
    %458 = vmatprep.subr.mxu0 0.0
    %459 = vmatpush1.msra.mxu0 0.0
    %460 = vmatprep.subr.mxu0 0.0
    %461 = vmatpush1.msra.mxu0 0.0
    %462 = vmatprep.subr.mxu0 0.0
    %463 = vmatpush1.msra.mxu0 0.0
    %464 = vmatprep.subr.mxu0 0.0
    %465 = vmatpush1.msra.mxu0 0.0
    %466 = vmatprep.subr.mxu0 0.0
    %467 = vmatpush1.msra.mxu0 0.0
    %468 = vmatprep.subr.mxu0 0.0
    %469 = vmatpush1.msra.mxu0 0.0
    %470 = vmatprep.subr.mxu0 0.0
    %471 = vmatpush1.msra.mxu0 0.0
    %472 = vmatprep.subr.mxu0 0.0
    %473 = vmatpush1.msra.mxu0 0.0
    %474 = vmatprep.subr.mxu0 0.0
    %475 = vmatpush1.msra.mxu0 0.0
    %476 = vmatprep.subr.mxu0 0.0
    %477 = vmatpush1.msra.mxu0 0.0
    %478 = vmatprep.subr.mxu0 0.0
    %479 = vmatpush1.msra.mxu0 0.0
    %480 = vmatprep.subr.mxu0 0.0
    %481 = vmatpush1.msra.mxu0 0.0
    %482 = vmatprep.subr.mxu0 0.0
    %483 = vmatpush1.msra.mxu0 0.0
    %484 = vmatprep.subr.mxu0 0.0
    %485 = vmatpush1.msra.mxu0 0.0
    %486 = vmatprep.subr.mxu0 0.0
    %487 = vmatpush1.msra.mxu0 0.0
    %488 = vmatprep.mubr.f32.mxu0 0.0
    %489 = vmatmul.mubr.f32.gmra.mrb[0].mxu0 %v422
    %v490 = vpop.f32.mrb[0].mxu0
    %v491 = vadd.f32 0.0, %v490
    %v492 = vpop.f32.mrb[0].mxu0
    %493 = vdwg.mxu0
    %v494 = vadd.f32 %v414, %v491
    %v495 = vxor.u32 %v494, 2147483648
    %v496 = vmul.f32 %v495, 1.442695
    %v497 = vpow.pop %v496
    %v498 = vadd.f32 %v497, 1.0
    %v499 = vrcp.pop %v498
    %v500 = vmul.f32 1.0, %v499
    %v501 = vld [vmem:[#allocation14] sm:$0x1]
    %v503 = vlaneseq
    %v504 = vshrl.u32 %v503, 7
    %v505 = vsub.s32 0, %v504
    %v506 = vrot.slane %v501, %v505
    %507 = vrot.lane.b32.xlu0 %v506, 64
    %v508 = vpop.permute.xlu0 %507
    %v510 = vadd.f32 %v491, %v508
    %512 = vrot.lane.b32.xlu0 %v510, 64
    %v513 = vpop.permute.xlu0 %512
    %v515 = vmul.f32 %v500, %v513
    %517 = vrot.lane.b32.xlu0 %v515, 64
    %v518 = vpop.permute.xlu0 %517
    %v520 = vadd.f32 %v414, %v518
    %v521 = vtanh.pop %v520
    %v522 = vsub.f32 1.0, %v500
    %524 = vrot.lane.b32.xlu0 %v521, 96
    %v525 = vpop.permute.xlu0 %524
    %v527 = vmul.f32 %v522, %v525
    %528 = vrot.lane.b32.xlu0 %v331, 32
    %v529 = vpop.permute.xlu0 %528
    %v531 = vmul.f32 %v500, %v529
    %v532 = vadd.f32 %v527, %v531
    %534 = vrot.lane.b32.xlu0 %v532, 96
    %v535 = vpop.permute.xlu0 %534
    %537 = vst.msk [vmem:[#allocation2] sm:$0x3] %vm145, %v535
    %s538 = scalar_lea.vmem [#allocation2], 2
    %v539 = vld [vmem:[%s538] sm:$0x3]
    %s540 = scalar_lea.vmem [#allocation10], 32
    %v541 = vld [vmem:[%s540] sm:$0xff]
    %v542 = vld [vmem:[%s540 + $0x8] sm:$0xff]
    %v543 = vld [vmem:[%s540 + $0x10] sm:$0xff]
    %v544 = vld [vmem:[%s540 + $0x18] sm:$0xff]
    %s545 = scalar_lea.vmem [#allocation13], 1
    %v546 = vld [vmem:[%s545] sm:$0x1]
    %v548 = vlaneseq
    %v549 = vshrl.u32 %v548, 7
    %v550 = vsub.s32 0, %v549
    %v551 = vrot.slane %v546, %v550
    %v553 = vsel %vm343, %v535, 0
    %555 = vmatprep.subr.mxu0 0.0
    %556 = vmatpush1.msra.mxu0 %v541
    %557 = vmatprep.subr.mxu0 0.0
    %558 = vmatpush1.msra.mxu0 %v542
    %559 = vmatprep.subr.mxu0 0.0
    %560 = vmatpush1.msra.mxu0 %v543
    %561 = vmatprep.subr.mxu0 0.0
    %562 = vmatpush1.msra.mxu0 %v544
    %563 = vmatprep.subr.mxu0 0.0
    %564 = vmatpush1.msra.mxu0 0.0
    %565 = vmatprep.subr.mxu0 0.0
    %566 = vmatpush1.msra.mxu0 0.0
    %567 = vmatprep.subr.mxu0 0.0
    %568 = vmatpush1.msra.mxu0 0.0
    %569 = vmatprep.subr.mxu0 0.0
    %570 = vmatpush1.msra.mxu0 0.0
    %571 = vmatprep.subr.mxu0 0.0
    %572 = vmatpush1.msra.mxu0 0.0
    %573 = vmatprep.subr.mxu0 0.0
    %574 = vmatpush1.msra.mxu0 0.0
    %575 = vmatprep.subr.mxu0 0.0
    %576 = vmatpush1.msra.mxu0 0.0
    %577 = vmatprep.subr.mxu0 0.0
    %578 = vmatpush1.msra.mxu0 0.0
    %579 = vmatprep.subr.mxu0 0.0
    %580 = vmatpush1.msra.mxu0 0.0
    %581 = vmatprep.subr.mxu0 0.0
    %582 = vmatpush1.msra.mxu0 0.0
    %583 = vmatprep.subr.mxu0 0.0
    %584 = vmatpush1.msra.mxu0 0.0
    %585 = vmatprep.subr.mxu0 0.0
    %586 = vmatpush1.msra.mxu0 0.0
    %587 = vmatprep.subr.mxu0 0.0
    %588 = vmatpush1.msra.mxu0 0.0
    %589 = vmatprep.subr.mxu0 0.0
    %590 = vmatpush1.msra.mxu0 0.0
    %591 = vmatprep.subr.mxu0 0.0
    %592 = vmatpush1.msra.mxu0 0.0
    %593 = vmatprep.subr.mxu0 0.0
    %594 = vmatpush1.msra.mxu0 0.0
    %595 = vmatprep.subr.mxu0 0.0
    %596 = vmatpush1.msra.mxu0 0.0
    %597 = vmatprep.subr.mxu0 0.0
    %598 = vmatpush1.msra.mxu0 0.0
    %599 = vmatprep.subr.mxu0 0.0
    %600 = vmatpush1.msra.mxu0 0.0
    %601 = vmatprep.subr.mxu0 0.0
    %602 = vmatpush1.msra.mxu0 0.0
    %603 = vmatprep.subr.mxu0 0.0
    %604 = vmatpush1.msra.mxu0 0.0
    %605 = vmatprep.subr.mxu0 0.0
    %606 = vmatpush1.msra.mxu0 0.0
    %607 = vmatprep.subr.mxu0 0.0
    %608 = vmatpush1.msra.mxu0 0.0
    %609 = vmatprep.subr.mxu0 0.0
    %610 = vmatpush1.msra.mxu0 0.0
    %611 = vmatprep.subr.mxu0 0.0
    %612 = vmatpush1.msra.mxu0 0.0
    %613 = vmatprep.subr.mxu0 0.0
    %614 = vmatpush1.msra.mxu0 0.0
    %615 = vmatprep.subr.mxu0 0.0
    %616 = vmatpush1.msra.mxu0 0.0
    %617 = vmatprep.subr.mxu0 0.0
    %618 = vmatpush1.msra.mxu0 0.0
    %619 = vmatprep.mubr.f32.mxu0 0.0
    %620 = vmatmul.mubr.f32.gmra.mrb[0].mxu0 %v553
    %v621 = vpop.f32.mrb[0].mxu0
    %v622 = vadd.f32 %v551, %v621
    %v623 = vpop.f32.mrb[0].mxu0
    %624 = vdwg.mxu0
    %s625 = scalar_lea.vmem [#allocation11], 32
    %v626 = vld [vmem:[%s625] sm:$0xff]
    %v627 = vld [vmem:[%s625 + $0x8] sm:$0xff]
    %v628 = vld [vmem:[%s625 + $0x10] sm:$0xff]
    %v629 = vld [vmem:[%s625 + $0x18] sm:$0xff]
    %v631 = vsel %vm343, %v539, 0
    %633 = vmatprep.subr.mxu0 0.0
    %634 = vmatpush1.msra.mxu0 %v626
    %635 = vmatprep.subr.mxu0 0.0
    %636 = vmatpush1.msra.mxu0 %v627
    %637 = vmatprep.subr.mxu0 0.0
    %638 = vmatpush1.msra.mxu0 %v628
    %639 = vmatprep.subr.mxu0 0.0
    %640 = vmatpush1.msra.mxu0 %v629
    %641 = vmatprep.subr.mxu0 0.0
    %642 = vmatpush1.msra.mxu0 0.0
    %643 = vmatprep.subr.mxu0 0.0
    %644 = vmatpush1.msra.mxu0 0.0
    %645 = vmatprep.subr.mxu0 0.0
    %646 = vmatpush1.msra.mxu0 0.0
    %647 = vmatprep.subr.mxu0 0.0
    %648 = vmatpush1.msra.mxu0 0.0
    %649 = vmatprep.subr.mxu0 0.0
    %650 = vmatpush1.msra.mxu0 0.0
    %651 = vmatprep.subr.mxu0 0.0
    %652 = vmatpush1.msra.mxu0 0.0
    %653 = vmatprep.subr.mxu0 0.0
    %654 = vmatpush1.msra.mxu0 0.0
    %655 = vmatprep.subr.mxu0 0.0
    %656 = vmatpush1.msra.mxu0 0.0
    %657 = vmatprep.subr.mxu0 0.0
    %658 = vmatpush1.msra.mxu0 0.0
    %659 = vmatprep.subr.mxu0 0.0
    %660 = vmatpush1.msra.mxu0 0.0
    %661 = vmatprep.subr.mxu0 0.0
    %662 = vmatpush1.msra.mxu0 0.0
    %663 = vmatprep.subr.mxu0 0.0
    %664 = vmatpush1.msra.mxu0 0.0
    %665 = vmatprep.subr.mxu0 0.0
    %666 = vmatpush1.msra.mxu0 0.0
    %667 = vmatprep.subr.mxu0 0.0
    %668 = vmatpush1.msra.mxu0 0.0
    %669 = vmatprep.subr.mxu0 0.0
    %670 = vmatpush1.msra.mxu0 0.0
    %671 = vmatprep.subr.mxu0 0.0
    %672 = vmatpush1.msra.mxu0 0.0
    %673 = vmatprep.subr.mxu0 0.0
    %674 = vmatpush1.msra.mxu0 0.0
    %675 = vmatprep.subr.mxu0 0.0
    %676 = vmatpush1.msra.mxu0 0.0
    %677 = vmatprep.subr.mxu0 0.0
    %678 = vmatpush1.msra.mxu0 0.0
    %679 = vmatprep.subr.mxu0 0.0
    %680 = vmatpush1.msra.mxu0 0.0
    %681 = vmatprep.subr.mxu0 0.0
    %682 = vmatpush1.msra.mxu0 0.0
    %683 = vmatprep.subr.mxu0 0.0
    %684 = vmatpush1.msra.mxu0 0.0
    %685 = vmatprep.subr.mxu0 0.0
    %686 = vmatpush1.msra.mxu0 0.0
    %687 = vmatprep.subr.mxu0 0.0
    %688 = vmatpush1.msra.mxu0 0.0
    %689 = vmatprep.subr.mxu0 0.0
    %690 = vmatpush1.msra.mxu0 0.0
    %691 = vmatprep.subr.mxu0 0.0
    %692 = vmatpush1.msra.mxu0 0.0
    %693 = vmatprep.subr.mxu0 0.0
    %694 = vmatpush1.msra.mxu0 0.0
    %695 = vmatprep.subr.mxu0 0.0
    %696 = vmatpush1.msra.mxu0 0.0
    %697 = vmatprep.mubr.f32.mxu0 0.0
    %698 = vmatmul.mubr.f32.gmra.mrb[0].mxu0 %v631
    %v699 = vpop.f32.mrb[0].mxu0
    %v700 = vadd.f32 0.0, %v699
    %v701 = vpop.f32.mrb[0].mxu0
    %702 = vdwg.mxu0
    %v703 = vadd.f32 %v622, %v700
    %v704 = vxor.u32 %v703, 2147483648
    %v705 = vmul.f32 %v704, 1.442695
    %v706 = vpow.pop %v705
    %v707 = vadd.f32 %v706, 1.0
    %v708 = vrcp.pop %v707
    %v709 = vmul.f32 1.0, %v708
    %s710 = scalar_lea.vmem [#allocation14], 1
    %v711 = vld [vmem:[%s710] sm:$0x1]
    %v713 = vlaneseq
    %v714 = vshrl.u32 %v713, 7
    %v715 = vsub.s32 0, %v714
    %v716 = vrot.slane %v711, %v715
    %717 = vrot.lane.b32.xlu0 %v716, 64
    %v718 = vpop.permute.xlu0 %717
    %v720 = vadd.f32 %v700, %v718
    %722 = vrot.lane.b32.xlu0 %v720, 64
    %v723 = vpop.permute.xlu0 %722
    %v725 = vmul.f32 %v709, %v723
    %727 = vrot.lane.b32.xlu0 %v725, 64
    %v728 = vpop.permute.xlu0 %727
    %v730 = vadd.f32 %v622, %v728
    %v731 = vtanh.pop %v730
    %v732 = vsub.f32 1.0, %v709
    %734 = vrot.lane.b32.xlu0 %v731, 96
    %v735 = vpop.permute.xlu0 %734
    %v737 = vmul.f32 %v732, %v735
    %738 = vrot.lane.b32.xlu0 %v539, 32
    %v739 = vpop.permute.xlu0 %738
    %v741 = vmul.f32 %v709, %v739
    %v742 = vadd.f32 %v737, %v741
    %744 = vrot.lane.b32.xlu0 %v742, 96
    %v745 = vpop.permute.xlu0 %744
    %747 = vst.msk [vmem:[%s538] sm:$0x3] %vm145, %v745
    %s748 = scalar_lea.vmem [#allocation2], 4
    %v749 = vld [vmem:[%s748] sm:$0x3]
    %s750 = scalar_lea.vmem [#allocation10], 64
    %v751 = vld [vmem:[%s750] sm:$0xff]
    %v752 = vld [vmem:[%s750 + $0x8] sm:$0xff]
    %v753 = vld [vmem:[%s750 + $0x10] sm:$0xff]
    %v754 = vld [vmem:[%s750 + $0x18] sm:$0xff]
    %s755 = scalar_lea.vmem [#allocation13], 2
    %v756 = vld [vmem:[%s755] sm:$0x1]
    %v758 = vlaneseq
    %v759 = vshrl.u32 %v758, 7
    %v760 = vsub.s32 0, %v759
    %v761 = vrot.slane %v756, %v760
    %v763 = vsel %vm343, %v745, 0
    %765 = vmatprep.subr.mxu0 0.0
    %766 = vmatpush1.msra.mxu0 %v751
    %767 = vmatprep.subr.mxu0 0.0
    %768 = vmatpush1.msra.mxu0 %v752
    %769 = vmatprep.subr.mxu0 0.0
    %770 = vmatpush1.msra.mxu0 %v753
    %771 = vmatprep.subr.mxu0 0.0
    %772 = vmatpush1.msra.mxu0 %v754
    %773 = vmatprep.subr.mxu0 0.0
    %774 = vmatpush1.msra.mxu0 0.0
    %775 = vmatprep.subr.mxu0 0.0
    %776 = vmatpush1.msra.mxu0 0.0
    %777 = vmatprep.subr.mxu0 0.0
    %778 = vmatpush1.msra.mxu0 0.0
    %779 = vmatprep.subr.mxu0 0.0
    %780 = vmatpush1.msra.mxu0 0.0
    %781 = vmatprep.subr.mxu0 0.0
    %782 = vmatpush1.msra.mxu0 0.0
    %783 = vmatprep.subr.mxu0 0.0
    %784 = vmatpush1.msra.mxu0 0.0
    %785 = vmatprep.subr.mxu0 0.0
    %786 = vmatpush1.msra.mxu0 0.0
    %787 = vmatprep.subr.mxu0 0.0
    %788 = vmatpush1.msra.mxu0 0.0
    %789 = vmatprep.subr.mxu0 0.0
    %790 = vmatpush1.msra.mxu0 0.0
    %791 = vmatprep.subr.mxu0 0.0
    %792 = vmatpush1.msra.mxu0 0.0
    %793 = vmatprep.subr.mxu0 0.0
    %794 = vmatpush1.msra.mxu0 0.0
    %795 = vmatprep.subr.mxu0 0.0
    %796 = vmatpush1.msra.mxu0 0.0
    %797 = vmatprep.subr.mxu0 0.0
    %798 = vmatpush1.msra.mxu0 0.0
    %799 = vmatprep.subr.mxu0 0.0
    %800 = vmatpush1.msra.mxu0 0.0
    %801 = vmatprep.subr.mxu0 0.0
    %802 = vmatpush1.msra.mxu0 0.0
    %803 = vmatprep.subr.mxu0 0.0
    %804 = vmatpush1.msra.mxu0 0.0
    %805 = vmatprep.subr.mxu0 0.0
    %806 = vmatpush1.msra.mxu0 0.0
    %807 = vmatprep.subr.mxu0 0.0
    %808 = vmatpush1.msra.mxu0 0.0
    %809 = vmatprep.subr.mxu0 0.0
    %810 = vmatpush1.msra.mxu0 0.0
    %811 = vmatprep.subr.mxu0 0.0
    %812 = vmatpush1.msra.mxu0 0.0
    %813 = vmatprep.subr.mxu0 0.0
    %814 = vmatpush1.msra.mxu0 0.0
    %815 = vmatprep.subr.mxu0 0.0
    %816 = vmatpush1.msra.mxu0 0.0
    %817 = vmatprep.subr.mxu0 0.0
    %818 = vmatpush1.msra.mxu0 0.0
    %819 = vmatprep.subr.mxu0 0.0
    %820 = vmatpush1.msra.mxu0 0.0
    %821 = vmatprep.subr.mxu0 0.0
    %822 = vmatpush1.msra.mxu0 0.0
    %823 = vmatprep.subr.mxu0 0.0
    %824 = vmatpush1.msra.mxu0 0.0
    %825 = vmatprep.subr.mxu0 0.0
    %826 = vmatpush1.msra.mxu0 0.0
    %827 = vmatprep.subr.mxu0 0.0
    %828 = vmatpush1.msra.mxu0 0.0
    %829 = vmatprep.mubr.f32.mxu0 0.0
    %830 = vmatmul.mubr.f32.gmra.mrb[0].mxu0 %v763
    %v831 = vpop.f32.mrb[0].mxu0
    %v832 = vadd.f32 %v761, %v831
    %v833 = vpop.f32.mrb[0].mxu0
    %834 = vdwg.mxu0
    %s835 = scalar_lea.vmem [#allocation11], 64
    %v836 = vld [vmem:[%s835] sm:$0xff]
    %v837 = vld [vmem:[%s835 + $0x8] sm:$0xff]
    %v838 = vld [vmem:[%s835 + $0x10] sm:$0xff]
    %v839 = vld [vmem:[%s835 + $0x18] sm:$0xff]
    %v841 = vsel %vm343, %v749, 0
    %843 = vmatprep.subr.mxu0 0.0
    %844 = vmatpush1.msra.mxu0 %v836
    %845 = vmatprep.subr.mxu0 0.0
    %846 = vmatpush1.msra.mxu0 %v837
    %847 = vmatprep.subr.mxu0 0.0
    %848 = vmatpush1.msra.mxu0 %v838
    %849 = vmatprep.subr.mxu0 0.0
    %850 = vmatpush1.msra.mxu0 %v839
    %851 = vmatprep.subr.mxu0 0.0
    %852 = vmatpush1.msra.mxu0 0.0
    %853 = vmatprep.subr.mxu0 0.0
    %854 = vmatpush1.msra.mxu0 0.0
    %855 = vmatprep.subr.mxu0 0.0
    %856 = vmatpush1.msra.mxu0 0.0
    %857 = vmatprep.subr.mxu0 0.0
    %858 = vmatpush1.msra.mxu0 0.0
    %859 = vmatprep.subr.mxu0 0.0
    %860 = vmatpush1.msra.mxu0 0.0
    %861 = vmatprep.subr.mxu0 0.0
    %862 = vmatpush1.msra.mxu0 0.0
    %863 = vmatprep.subr.mxu0 0.0
    %864 = vmatpush1.msra.mxu0 0.0
    %865 = vmatprep.subr.mxu0 0.0
    %866 = vmatpush1.msra.mxu0 0.0
    %867 = vmatprep.subr.mxu0 0.0
    %868 = vmatpush1.msra.mxu0 0.0
    %869 = vmatprep.subr.mxu0 0.0
    %870 = vmatpush1.msra.mxu0 0.0
    %871 = vmatprep.subr.mxu0 0.0
    %872 = vmatpush1.msra.mxu0 0.0
    %873 = vmatprep.subr.mxu0 0.0
    %874 = vmatpush1.msra.mxu0 0.0
    %875 = vmatprep.subr.mxu0 0.0
    %876 = vmatpush1.msra.mxu0 0.0
    %877 = vmatprep.subr.mxu0 0.0
    %878 = vmatpush1.msra.mxu0 0.0
    %879 = vmatprep.subr.mxu0 0.0
    %880 = vmatpush1.msra.mxu0 0.0
    %881 = vmatprep.subr.mxu0 0.0
    %882 = vmatpush1.msra.mxu0 0.0
    %883 = vmatprep.subr.mxu0 0.0
    %884 = vmatpush1.msra.mxu0 0.0
    %885 = vmatprep.subr.mxu0 0.0
    %886 = vmatpush1.msra.mxu0 0.0
    %887 = vmatprep.subr.mxu0 0.0
    %888 = vmatpush1.msra.mxu0 0.0
    %889 = vmatprep.subr.mxu0 0.0
    %890 = vmatpush1.msra.mxu0 0.0
    %891 = vmatprep.subr.mxu0 0.0
    %892 = vmatpush1.msra.mxu0 0.0
    %893 = vmatprep.subr.mxu0 0.0
    %894 = vmatpush1.msra.mxu0 0.0
    %895 = vmatprep.subr.mxu0 0.0
    %896 = vmatpush1.msra.mxu0 0.0
    %897 = vmatprep.subr.mxu0 0.0
    %898 = vmatpush1.msra.mxu0 0.0
    %899 = vmatprep.subr.mxu0 0.0
    %900 = vmatpush1.msra.mxu0 0.0
    %901 = vmatprep.subr.mxu0 0.0
    %902 = vmatpush1.msra.mxu0 0.0
    %903 = vmatprep.subr.mxu0 0.0
    %904 = vmatpush1.msra.mxu0 0.0
    %905 = vmatprep.subr.mxu0 0.0
    %906 = vmatpush1.msra.mxu0 0.0
    %907 = vmatprep.mubr.f32.mxu0 0.0
    %908 = vmatmul.mubr.f32.gmra.mrb[0].mxu0 %v841
    %v909 = vpop.f32.mrb[0].mxu0
    %v910 = vadd.f32 0.0, %v909
    %v911 = vpop.f32.mrb[0].mxu0
    %912 = vdwg.mxu0
    %v913 = vadd.f32 %v832, %v910
    %v914 = vxor.u32 %v913, 2147483648
    %v915 = vmul.f32 %v914, 1.442695
    %v916 = vpow.pop %v915
    %v917 = vadd.f32 %v916, 1.0
    %v918 = vrcp.pop %v917
    %v919 = vmul.f32 1.0, %v918
    %s920 = scalar_lea.vmem [#allocation14], 2
    %v921 = vld [vmem:[%s920] sm:$0x1]
    %v923 = vlaneseq
    %v924 = vshrl.u32 %v923, 7
    %v925 = vsub.s32 0, %v924
    %v926 = vrot.slane %v921, %v925
    %927 = vrot.lane.b32.xlu0 %v926, 64
    %v928 = vpop.permute.xlu0 %927
    %v930 = vadd.f32 %v910, %v928
    %932 = vrot.lane.b32.xlu0 %v930, 64
    %v933 = vpop.permute.xlu0 %932
    %v935 = vmul.f32 %v919, %v933
    %937 = vrot.lane.b32.xlu0 %v935, 64
    %v938 = vpop.permute.xlu0 %937
    %v940 = vadd.f32 %v832, %v938
    %v941 = vtanh.pop %v940
    %v942 = vsub.f32 1.0, %v919
    %944 = vrot.lane.b32.xlu0 %v941, 96
    %v945 = vpop.permute.xlu0 %944
    %v947 = vmul.f32 %v942, %v945
    %948 = vrot.lane.b32.xlu0 %v749, 32
    %v949 = vpop.permute.xlu0 %948
    %v951 = vmul.f32 %v919, %v949
    %v952 = vadd.f32 %v947, %v951
    %954 = vrot.lane.b32.xlu0 %v952, 96
    %v955 = vpop.permute.xlu0 %954
    %957 = vst.msk [vmem:[%s748] sm:$0x3] %vm145, %v955
    %v958 = vld [vmem:[#allocation16] sm:$0xff]
    %v959 = vld [vmem:[#allocation16 + $0x8] sm:$0xff]
    %v960 = vld [vmem:[#allocation16 + $0x10] sm:$0xff]
    %v961 = vld [vmem:[#allocation16 + $0x18] sm:$0xff]
    %962 = vmatprep.subr.mxu0 0.0
    %963 = vmatpush1.msra.mxu0 %v958
    %964 = vmatprep.subr.mxu0 0.0
    %965 = vmatpush1.msra.mxu0 %v959
    %966 = vmatprep.subr.mxu0 0.0
    %967 = vmatpush1.msra.mxu0 %v960
    %968 = vmatprep.subr.mxu0 0.0
    %969 = vmatpush1.msra.mxu0 %v961
    %970 = vmatprep.subr.mxu0 0.0
    %971 = vmatpush1.msra.mxu0 0.0
    %972 = vmatprep.subr.mxu0 0.0
    %973 = vmatpush1.msra.mxu0 0.0
    %974 = vmatprep.subr.mxu0 0.0
    %975 = vmatpush1.msra.mxu0 0.0
    %976 = vmatprep.subr.mxu0 0.0
    %977 = vmatpush1.msra.mxu0 0.0
    %978 = vmatprep.subr.mxu0 0.0
    %979 = vmatpush1.msra.mxu0 0.0
    %980 = vmatprep.subr.mxu0 0.0
    %981 = vmatpush1.msra.mxu0 0.0
    %982 = vmatprep.subr.mxu0 0.0
    %983 = vmatpush1.msra.mxu0 0.0
    %984 = vmatprep.subr.mxu0 0.0
    %985 = vmatpush1.msra.mxu0 0.0
    %986 = vmatprep.subr.mxu0 0.0
    %987 = vmatpush1.msra.mxu0 0.0
    %988 = vmatprep.subr.mxu0 0.0
    %989 = vmatpush1.msra.mxu0 0.0
    %990 = vmatprep.subr.mxu0 0.0
    %991 = vmatpush1.msra.mxu0 0.0
    %992 = vmatprep.subr.mxu0 0.0
    %993 = vmatpush1.msra.mxu0 0.0
    %994 = vmatprep.subr.mxu0 0.0
    %995 = vmatpush1.msra.mxu0 0.0
    %996 = vmatprep.subr.mxu0 0.0
    %997 = vmatpush1.msra.mxu0 0.0
    %998 = vmatprep.subr.mxu0 0.0
    %999 = vmatpush1.msra.mxu0 0.0
    %1000 = vmatprep.subr.mxu0 0.0
    %1001 = vmatpush1.msra.mxu0 0.0
    %1002 = vmatprep.subr.mxu0 0.0
    %1003 = vmatpush1.msra.mxu0 0.0
    %1004 = vmatprep.subr.mxu0 0.0
    %1005 = vmatpush1.msra.mxu0 0.0
    %1006 = vmatprep.subr.mxu0 0.0
    %1007 = vmatpush1.msra.mxu0 0.0
    %1008 = vmatprep.subr.mxu0 0.0
    %1009 = vmatpush1.msra.mxu0 0.0
    %1010 = vmatprep.subr.mxu0 0.0
    %1011 = vmatpush1.msra.mxu0 0.0
    %1012 = vmatprep.subr.mxu0 0.0
    %1013 = vmatpush1.msra.mxu0 0.0
    %1014 = vmatprep.subr.mxu0 0.0
    %1015 = vmatpush1.msra.mxu0 0.0
    %1016 = vmatprep.subr.mxu0 0.0
    %1017 = vmatpush1.msra.mxu0 0.0
    %1018 = vmatprep.subr.mxu0 0.0
    %1019 = vmatpush1.msra.mxu0 0.0
    %1020 = vmatprep.subr.mxu0 0.0
    %1021 = vmatpush1.msra.mxu0 0.0
    %1022 = vmatprep.subr.mxu0 0.0
    %1023 = vmatpush1.msra.mxu0 0.0
    %1024 = vmatprep.subr.mxu0 0.0
    %1025 = vmatpush1.msra.mxu0 0.0
    %1026 = vmatprep.mubr.f32.mxu0 0.0
    %1027 = vmatmul.mubr.f32.gmra.mrb[0].mxu0 %v553
    %v1028 = vpop.f32.mrb[0].mxu0
    %v1029 = vadd.f32 0.0, %v1028
    %v1030 = vpop.f32.mrb[0].mxu0
    %1031 = vdwg.mxu0
    %v1033 = vlaneseq
    %v1034 = vshrl.u32 %v1033, 7
    %v1035 = vsub.s32 0, %v1034
    %v1036 = vrot.slane %v154, %v1035
    %v1038 = vadd.f32 %v1036, %v1029
    %s1039 = scalar_lea.vmem [#allocation16], 32
    %v1040 = vld [vmem:[%s1039] sm:$0xff]
    %v1041 = vld [vmem:[%s1039 + $0x8] sm:$0xff]
    %v1042 = vld [vmem:[%s1039 + $0x10] sm:$0xff]
    %v1043 = vld [vmem:[%s1039 + $0x18] sm:$0xff]
    %1044 = vmatprep.subr.mxu0 0.0
    %1045 = vmatpush1.msra.mxu0 %v1040
    %1046 = vmatprep.subr.mxu0 0.0
    %1047 = vmatpush1.msra.mxu0 %v1041
    %1048 = vmatprep.subr.mxu0 0.0
    %1049 = vmatpush1.msra.mxu0 %v1042
    %1050 = vmatprep.subr.mxu0 0.0
    %1051 = vmatpush1.msra.mxu0 %v1043
    %1052 = vmatprep.subr.mxu0 0.0
    %1053 = vmatpush1.msra.mxu0 0.0
    %1054 = vmatprep.subr.mxu0 0.0
    %1055 = vmatpush1.msra.mxu0 0.0
    %1056 = vmatprep.subr.mxu0 0.0
    %1057 = vmatpush1.msra.mxu0 0.0
    %1058 = vmatprep.subr.mxu0 0.0
    %1059 = vmatpush1.msra.mxu0 0.0
    %1060 = vmatprep.subr.mxu0 0.0
    %1061 = vmatpush1.msra.mxu0 0.0
    %1062 = vmatprep.subr.mxu0 0.0
    %1063 = vmatpush1.msra.mxu0 0.0
    %1064 = vmatprep.subr.mxu0 0.0
    %1065 = vmatpush1.msra.mxu0 0.0
    %1066 = vmatprep.subr.mxu0 0.0
    %1067 = vmatpush1.msra.mxu0 0.0
    %1068 = vmatprep.subr.mxu0 0.0
    %1069 = vmatpush1.msra.mxu0 0.0
    %1070 = vmatprep.subr.mxu0 0.0
    %1071 = vmatpush1.msra.mxu0 0.0
    %1072 = vmatprep.subr.mxu0 0.0
    %1073 = vmatpush1.msra.mxu0 0.0
    %1074 = vmatprep.subr.mxu0 0.0
    %1075 = vmatpush1.msra.mxu0 0.0
    %1076 = vmatprep.subr.mxu0 0.0
    %1077 = vmatpush1.msra.mxu0 0.0
    %1078 = vmatprep.subr.mxu0 0.0
    %1079 = vmatpush1.msra.mxu0 0.0
    %1080 = vmatprep.subr.mxu0 0.0
    %1081 = vmatpush1.msra.mxu0 0.0
    %1082 = vmatprep.subr.mxu0 0.0
    %1083 = vmatpush1.msra.mxu0 0.0
    %1084 = vmatprep.subr.mxu0 0.0
    %1085 = vmatpush1.msra.mxu0 0.0
    %1086 = vmatprep.subr.mxu0 0.0
    %1087 = vmatpush1.msra.mxu0 0.0
    %1088 = vmatprep.subr.mxu0 0.0
    %1089 = vmatpush1.msra.mxu0 0.0
    %1090 = vmatprep.subr.mxu0 0.0
    %1091 = vmatpush1.msra.mxu0 0.0
    %1092 = vmatprep.subr.mxu0 0.0
    %1093 = vmatpush1.msra.mxu0 0.0
    %1094 = vmatprep.subr.mxu0 0.0
    %1095 = vmatpush1.msra.mxu0 0.0
    %1096 = vmatprep.subr.mxu0 0.0
    %1097 = vmatpush1.msra.mxu0 0.0
    %1098 = vmatprep.subr.mxu0 0.0
    %1099 = vmatpush1.msra.mxu0 0.0
    %1100 = vmatprep.subr.mxu0 0.0
    %1101 = vmatpush1.msra.mxu0 0.0
    %1102 = vmatprep.subr.mxu0 0.0
    %1103 = vmatpush1.msra.mxu0 0.0
    %1104 = vmatprep.subr.mxu0 0.0
    %1105 = vmatpush1.msra.mxu0 0.0
    %1106 = vmatprep.subr.mxu0 0.0
    %1107 = vmatpush1.msra.mxu0 0.0
    %1108 = vmatprep.mubr.f32.mxu0 0.0
    %1109 = vmatmul.mubr.f32.gmra.mrb[0].mxu0 %v763
    %v1110 = vpop.f32.mrb[0].mxu0
    %v1111 = vadd.f32 0.0, %v1110
    %v1112 = vpop.f32.mrb[0].mxu0
    %1113 = vdwg.mxu0
    %v1114 = vadd.f32 %v1038, %v1111
    %s1115 = scalar_lea.vmem [#allocation16], 64
    %v1116 = vld [vmem:[%s1115] sm:$0xff]
    %v1117 = vld [vmem:[%s1115 + $0x8] sm:$0xff]
    %v1118 = vld [vmem:[%s1115 + $0x10] sm:$0xff]
    %v1119 = vld [vmem:[%s1115 + $0x18] sm:$0xff]
    %v1120 = vsel %vm343, %v955, 0
    %1122 = vmatprep.subr.mxu0 0.0
    %1123 = vmatpush1.msra.mxu0 %v1116
    %1124 = vmatprep.subr.mxu0 0.0
    %1125 = vmatpush1.msra.mxu0 %v1117
    %1126 = vmatprep.subr.mxu0 0.0
    %1127 = vmatpush1.msra.mxu0 %v1118
    %1128 = vmatprep.subr.mxu0 0.0
    %1129 = vmatpush1.msra.mxu0 %v1119
    %1130 = vmatprep.subr.mxu0 0.0
    %1131 = vmatpush1.msra.mxu0 0.0
    %1132 = vmatprep.subr.mxu0 0.0
    %1133 = vmatpush1.msra.mxu0 0.0
    %1134 = vmatprep.subr.mxu0 0.0
    %1135 = vmatpush1.msra.mxu0 0.0
    %1136 = vmatprep.subr.mxu0 0.0
    %1137 = vmatpush1.msra.mxu0 0.0
    %1138 = vmatprep.subr.mxu0 0.0
    %1139 = vmatpush1.msra.mxu0 0.0
    %1140 = vmatprep.subr.mxu0 0.0
    %1141 = vmatpush1.msra.mxu0 0.0
    %1142 = vmatprep.subr.mxu0 0.0
    %1143 = vmatpush1.msra.mxu0 0.0
    %1144 = vmatprep.subr.mxu0 0.0
    %1145 = vmatpush1.msra.mxu0 0.0
    %1146 = vmatprep.subr.mxu0 0.0
    %1147 = vmatpush1.msra.mxu0 0.0
    %1148 = vmatprep.subr.mxu0 0.0
    %1149 = vmatpush1.msra.mxu0 0.0
    %1150 = vmatprep.subr.mxu0 0.0
    %1151 = vmatpush1.msra.mxu0 0.0
    %1152 = vmatprep.subr.mxu0 0.0
    %1153 = vmatpush1.msra.mxu0 0.0
    %1154 = vmatprep.subr.mxu0 0.0
    %1155 = vmatpush1.msra.mxu0 0.0
    %1156 = vmatprep.subr.mxu0 0.0
    %1157 = vmatpush1.msra.mxu0 0.0
    %1158 = vmatprep.subr.mxu0 0.0
    %1159 = vmatpush1.msra.mxu0 0.0
    %1160 = vmatprep.subr.mxu0 0.0
    %1161 = vmatpush1.msra.mxu0 0.0
    %1162 = vmatprep.subr.mxu0 0.0
    %1163 = vmatpush1.msra.mxu0 0.0
    %1164 = vmatprep.subr.mxu0 0.0
    %1165 = vmatpush1.msra.mxu0 0.0
    %1166 = vmatprep.subr.mxu0 0.0
    %1167 = vmatpush1.msra.mxu0 0.0
    %1168 = vmatprep.subr.mxu0 0.0
    %1169 = vmatpush1.msra.mxu0 0.0
    %1170 = vmatprep.subr.mxu0 0.0
    %1171 = vmatpush1.msra.mxu0 0.0
    %1172 = vmatprep.subr.mxu0 0.0
    %1173 = vmatpush1.msra.mxu0 0.0
    %1174 = vmatprep.subr.mxu0 0.0
    %1175 = vmatpush1.msra.mxu0 0.0
    %1176 = vmatprep.subr.mxu0 0.0
    %1177 = vmatpush1.msra.mxu0 0.0
    %1178 = vmatprep.subr.mxu0 0.0
    %1179 = vmatpush1.msra.mxu0 0.0
    %1180 = vmatprep.subr.mxu0 0.0
    %1181 = vmatpush1.msra.mxu0 0.0
    %1182 = vmatprep.subr.mxu0 0.0
    %1183 = vmatpush1.msra.mxu0 0.0
    %1184 = vmatprep.subr.mxu0 0.0
    %1185 = vmatpush1.msra.mxu0 0.0
    %1186 = vmatprep.mubr.f32.mxu0 0.0
    %1187 = vmatmul.mubr.f32.gmra.mrb[0].mxu0 %v1120
    %v1188 = vpop.f32.mrb[0].mxu0
    %v1189 = vadd.f32 0.0, %v1188
    %v1190 = vpop.f32.mrb[0].mxu0
    %1191 = vdwg.mxu0
    %v1192 = vadd.f32 %v1114, %v1189
    %1193 = vst [vmem:[#allocation17] sm:$0x3] %v1192
    %v1194 = vld [vmem:[#allocation2] sm:$0x3]
    %v1195 = vld [vmem:[#allocation2 + $0x2] sm:$0x3]
    %v1196 = vld [vmem:[#allocation2 + $0x4] sm:$0x3]
    %1197 = vst.msk [vmem:[#allocation18] sm:$0x3] %vm145, %v1194
    %1198 = vst.msk [vmem:[#allocation18 + $0x2] sm:$0x3] %vm145, %v1195
    %1199 = vst.msk [vmem:[#allocation18 + $0x4] sm:$0x3] %vm145, %v1196
    // Predicated region
    $region74: #{performance_rnn_forward_seq.1} parent=1 // pred_check
      _
    $region75: #{performance_rnn_forward_seq.1} parent=1 // pred_check_branch
      %1201 = sbr.rel (0) target = $region77
    $region76: #{performance_rnn_forward_seq.1} parent=1 // pred_region
      %s1203 = ssub.s32 32, 32
      %1204 = vsyncadd [#allocation7], %s1203
      %s1206 = sshll.u32 [#allocation17], 4
      %s1207 = int_to_ptr.vmem [resolvable:$true] %s1206
      %1209 = dma.vmem_to_hbm [thread:$0]  %s1207, 32, %s12, [#allocation7]
    $region77: #{performance_rnn_forward_seq.1} parent=1 // pred_fallthru
      _
    // Predicated region
    $region78: #{performance_rnn_forward_seq.1} parent=1 // pred_check
      _
    $region79: #{performance_rnn_forward_seq.1} parent=1 // pred_check_branch
      %1211 = sbr.rel (0) target = $region81
    $region80: #{performance_rnn_forward_seq.1} parent=1 // pred_region
      %s1213 = ssub.s32 96, 96
      %1214 = vsyncadd [#allocation19], %s1213
      %s1215 = sshll.u32 [#allocation18], 4
      %s1216 = int_to_ptr.vmem [resolvable:$true] %s1215
      %1221 = dma.vmem_to_hbm [thread:$0]  %s1216, 96, %s13, [#allocation19], 32, 32, 2
    $region81: #{performance_rnn_forward_seq.1} parent=1 // pred_fallthru
      _
    // Predicated region
    $region82: #{performance_rnn_forward_seq.1} parent=1 // pred_check
      _
    $region83: #{performance_rnn_forward_seq.1} parent=1 // pred_check_branch
      %1223 = sbr.rel (0) target = $region85
    $region84: #{performance_rnn_forward_seq.1} parent=1 // pred_region
      %1224 = dma.done [#allocation7], 32
    $region85: #{performance_rnn_forward_seq.1} parent=1 // pred_fallthru
      _
    // Predicated region
    $region86: #{performance_rnn_forward_seq.1} parent=1 // pred_check
      _
    $region87: #{performance_rnn_forward_seq.1} parent=1 // pred_check_branch
      %1226 = sbr.rel (0) target = $region89
    $region88: #{performance_rnn_forward_seq.1} parent=1 // pred_region
      %1227 = dma.done [#allocation19], 96
    $region89: #{performance_rnn_forward_seq.1} parent=1 // pred_fallthru
      _
    %1228 = vsyncpa [#allocation6], 1
    %1229 = vsyncpa [#allocation9], 1
    %1230 = vsyncpa [#allocation12], 1
    %1231 = vsyncpa [#allocation15], 1
    %1232 = vsyncpa [#allocation7], 1
    %1233 = vsyncpa [#allocation19], 1

</llo_original>
